<compile_context>
chip_gen: v5e
topology: v5e:2x2
jax: 0.10.0
libtpu: 0.0.40
codegen_flags: <defaults>
</compile_context>

<pallas_src>
import functools

import numpy as np
import jax
import jax.numpy as jnp
from jax.experimental import pallas as pl
from jax.experimental.pallas import tpu as pltpu

# "cnf" config values (synthetic, small)
EMBED_DIM = 32
HIDDEN_SIZE = 32
NUM_LAYERS = 2
OUTPUT_SIZE = 16


# ----------------------------- One bidirectional LSTM layer (value-based) -----------------------------

def _bilstm_layer(xa, wih, whh_bf16, bias, *, T, Bq, H, collect_seq):
    """Bidirectional LSTM layer, fully VMEM/vreg-resident, no stores.

    xa:       (T*2Bq, D) arranged input: block t rows [0:Bq] = x[t], rows [Bq:2Bq] = x[T-1-t]
    wih:      (D, 8H)  = [W_ih_fwd^T | W_ih_bwd^T]            (f32)
    whh_bf16: (H, 8H)  = [W_hh_fwd^T | W_hh_bwd^T]            (bf16)
    bias:     (1, 8H)  = [b_fwd | b_bwd]   (b_ih + b_hh folded per direction)

    Returns (fwd_h list, bwd_h list, h_final); h_final rows [0:Bq] = forward h_n,
    rows [Bq:2Bq] = backward h_n.  Gate order is torch's i|f|g|o.
    """
    G = 4 * H
    R = 2 * Bq

    # Hoisted input projection for the whole sequence & both directions (off the serial chain).
    gxa_full = jnp.dot(xa, wih, preferred_element_type=jnp.float32) + bias      # (T*R, 8H)
    gxa3 = gxa_full.reshape(T, R, 2 * G)                                         # (T, R, 8H)
    fwd_rows3 = jax.lax.broadcasted_iota(jnp.int32, (T, R, G), 1) < Bq
    # Pre-arranged per-step gate inputs: one aligned (R, 4H) = (8, 128) tile per t.
    gxa = jnp.where(fwd_rows3, gxa3[:, :, :G], gxa3[:, :, G:])                   # (T, R, 4H)

    is_fwd = jax.lax.broadcasted_iota(jnp.int32, (R, G), 0) < Bq                 # (R, 4H)
    lane = jax.lax.broadcasted_iota(jnp.int32, (R, G), 1)
    is_g = (lane >= 2 * H) & (lane < 3 * H)                                      # cell-gate (tanh) cols

    h = jnp.zeros((R, H), jnp.float32)
    c = jnp.zeros((R, H), jnp.float32)
    fwd_h = [None] * T
    bwd_h = [None] * T

    for t in range(T):  # T is small & static -> fully unrolled, static indices everywhere
        # One recurrent matmul against both directions' W_hh (bf16 operands, f32 accumulate).
        big = jnp.dot(h.astype(jnp.bfloat16), whh_bf16,
                      preferred_element_type=jnp.float32)                        # (R, 8H)
        rec = jnp.where(is_fwd, big[:, :G], big[:, G:])                          # (R, 4H)
        gates = rec + gxa[t]                                                     # (R, 4H)

        # Whole-vreg EUP activations; lane-mask select tanh for the cell gate.
        act = jnp.where(is_g, jnp.tanh(gates), jax.nn.sigmoid(gates))
        i_g = act[:, 0 * H:1 * H]
        f_g = act[:, 1 * H:2 * H]
        g_g = act[:, 2 * H:3 * H]
        o_g = act[:, 3 * H:4 * H]

        c = f_g * c + i_g * g_g
        h = o_g * jnp.tanh(c)

        if collect_seq:
            fwd_h[t] = h[:Bq]            # forward hidden at time t
            bwd_h[T - 1 - t] = h[Bq:]    # backward hidden at time T-1-t

    return fwd_h, bwd_h, h


# ----------------------------- Fully fused forward kernel -----------------------------

def _fused_lstm_kernel(q1_ref, q2_ref, perm_ref,
                       wih1_ref, whh1_ref, b1_ref,
                       wih2_ref, whh2_ref, b2_ref,
                       ew1_ref, eb1_ref, ew2_ref, eb2_ref,
                       tw1_ref, tb1_ref, tw2_ref, tb2_ref,
                       out_ref, *, B, T, H):
    Bq = 2 * B
    E = q1_ref.shape[2]

    # In-kernel batch stacking + time-major / direction arrangement via one permutation matmul
    # (replaces the wrapper-side concat/transpose/reshape copy).
    xb = jnp.concatenate([q1_ref[...].reshape(B * T, E),
                          q2_ref[...].reshape(B * T, E)], axis=0)                # (2BT, E)
    xa1 = jnp.dot(perm_ref[...], xb, preferred_element_type=jnp.float32)         # (T*2Bq, E)

    # Layer 1: need the full bidirectional sequence output (input of layer 2).
    fwd_h, bwd_h, _ = _bilstm_layer(xa1, wih1_ref[...], whh1_ref[...], b1_ref[...],
                                    T=T, Bq=Bq, H=H, collect_seq=True)

    # Layer-2 arranged input built from layer-1 values (no VMEM scratch round-trip, no stores).
    x2 = [jnp.concatenate([fwd_h[t], bwd_h[t]], axis=1) for t in range(T)]       # (Bq, 2H) each
    xa2 = jnp.concatenate(
        [x2[t] if half == 0 else x2[T - 1 - t] for t in range(T) for half in (0, 1)],
        axis=0)                                                                  # (T*2Bq, 2H)

    # Layer 2: only the final hidden states are needed (h_n[-2], h_n[-1]).
    _, _, h_fin = _bilstm_layer(xa2, wih2_ref[...], whh2_ref[...], b2_ref[...],
                                T=T, Bq=Bq, H=H, collect_seq=False)

    feat = jnp.concatenate([h_fin[:Bq], h_fin[Bq:]], axis=1)                     # (Bq, 2H)

    # Extractor heads (shared weights; both queries live in the batch rows).
    a1 = jnp.maximum(jnp.dot(feat, ew1_ref[...], preferred_element_type=jnp.float32)
                     + eb1_ref[...], 0.0)                                        # (Bq, 64)
    y = jnp.dot(a1, ew2_ref[...], preferred_element_type=jnp.float32) + eb2_ref[...]  # (Bq, O)

    # rows 0..B-1 = extractor(q1), rows B..2B-1 = extractor(q2) -> feature concat, then top MLP.
    y12 = jnp.concatenate([y[:B], y[B:]], axis=1)                                # (B, 2O)
    a2 = jnp.maximum(jnp.dot(y12, tw1_ref[...], preferred_element_type=jnp.float32)
                     + tb1_ref[...], 0.0)                                        # (B, 10)
    out_ref[...] = jnp.dot(a2, tw2_ref[...], preferred_element_type=jnp.float32) + tb2_ref[...]


# ----------------------------- Permutation matrix (built at trace time) -----------------------------

def _build_perm(B, T):
    """(T*2Bq, 2BT) permutation: output block t = [x[t] rows ; x[T-1-t] rows] with
    sample order [q1_0..q1_{B-1}, q2_0..q2_{B-1}] inside each half."""
    Bq = 2 * B
    R = 2 * Bq
    perm = np.zeros((T * R, 2 * B * T), np.float32)
    for t in range(T):
        for s in range(R):
            tt = t if s < Bq else T - 1 - t
            sample = s if s < Bq else s - Bq
            if sample < B:
                src = sample * T + tt                       # q1 rows occupy [0, B*T)
            else:
                src = B * T + (sample - B) * T + tt         # q2 rows occupy [B*T, 2*B*T)
            perm[t * R + s, src] = 1.0
    return jnp.asarray(perm)


# ----------------------------- Wrapper (one pallas_call per forward) -----------------------------

def lstm_forward(q1, q2, packed):
    """Equivalent of LSTM.forward. q1, q2: (B, T, E) batch_first. Returns (B, 2)."""
    B, T, _ = q1.shape
    perm = _build_perm(B, T)
    vmem = pl.BlockSpec(memory_space=pltpu.MemorySpace.VMEM)
    operands = (q1, q2, perm) + tuple(packed["lstm"]) + tuple(packed["head"])
    return pl.pallas_call(
        functools.partial(_fused_lstm_kernel, B=B, T=T, H=HIDDEN_SIZE),
        out_shape=jax.ShapeDtypeStruct((B, 2), jnp.float32),
        in_specs=[vmem] * len(operands),
        out_specs=vmem,
    )(*operands)


# ----------------------------- Deterministic parameter init & packing -----------------------------

def _uniform(key, shape, scale):
    return jax.random.uniform(key, shape, jnp.float32, -scale, scale)


def init_params(key):
    """Torch-layout parameters: W_ih (4H, D), W_hh (4H, H), Linear W (out, in)."""
    H, E, L, O = HIDDEN_SIZE, EMBED_DIM, NUM_LAYERS, OUTPUT_SIZE
    k_lstm = 1.0 / (H ** 0.5)
    keys = iter(jax.random.split(key, 64))

    lstm_layers = []
    for layer in range(L):
        in_dim = E if layer == 0 else 2 * H
        dirs = []
        for _ in range(2):  # forward, backward
            w_ih = _uniform(next(keys), (4 * H, in_dim), k_lstm)
            w_hh = _uniform(next(keys), (4 * H, H), k_lstm)
            b_ih = _uniform(next(keys), (4 * H,), k_lstm)
            b_hh = _uniform(next(keys), (4 * H,), k_lstm)
            dirs.append((w_ih, w_hh, b_ih + b_hh))      # fold the two biases together
        lstm_layers.append(tuple(dirs))

    def linear(key, out_f, in_f):
        kw, kb = jax.random.split(key)
        s = 1.0 / (in_f ** 0.5)
        return _uniform(kw, (out_f, in_f), s), _uniform(kb, (out_f,), s)

    return {
        "lstm": lstm_layers,
        "ex_fc1": linear(next(keys), 64, 2 * H),
        "ex_fc2": linear(next(keys), O, 64),
        "top_fc1": linear(next(keys), 10, 2 * O),
        "top_fc2": linear(next(keys), 2, 10),
    }


def pack_params(p):
    """One-time re-layout of torch-style params into kernel-ready operands."""
    lstm_packed = []
    for (fw, bw) in p["lstm"]:
        wih_f, whh_f, b_f = fw
        wih_b, whh_b, b_b = bw
        lstm_packed.append(jnp.concatenate([wih_f.T, wih_b.T], axis=1))                         # (D, 8H) f32
        lstm_packed.append(jnp.concatenate([whh_f.T, whh_b.T], axis=1).astype(jnp.bfloat16))    # (H, 8H) bf16
        lstm_packed.append(jnp.concatenate([b_f, b_b]).reshape(1, -1))                          # (1, 8H) f32

    def dense(wb):
        w, b = wb
        return [w.T, b.reshape(1, -1)]

    head = (dense(p["ex_fc1"]) + dense(p["ex_fc2"])
            + dense(p["top_fc1"]) + dense(p["top_fc2"]))
    return {"lstm": tuple(lstm_packed), "head": tuple(head)}


if __name__ == "__main__":
    key = jax.random.PRNGKey(0)
    kp, k1, k2 = jax.random.split(key, 3)
    packed = pack_params(init_params(kp))

    B, T = 2, 8
    q1 = jax.random.normal(k1, (B, T, EMBED_DIM), jnp.float32)
    q2 = jax.random.normal(k2, (B, T, EMBED_DIM), jnp.float32)

    out = jax.jit(lstm_forward)(q1, q2, packed)
    out = jax.block_until_ready(out)
    assert out.shape == (B, 2), out.shape
    assert bool(jnp.all(jnp.isfinite(out)))
    print("KERNEL_OK")
</pallas_src>

<mosaic_0001>
module attributes {stable_mosaic.version = 11 : i64} {
  func.func @_fused_lstm_kernel(%arg0: memref<2x8x32xf32, #tpu.memory_space<vmem>>, %arg1: memref<2x8x32xf32, #tpu.memory_space<vmem>>, %arg2: memref<64x32xf32, #tpu.memory_space<vmem>>, %arg3: memref<32x256xf32, #tpu.memory_space<vmem>>, %arg4: memref<32x256xbf16, #tpu.memory_space<vmem>>, %arg5: memref<1x256xf32, #tpu.memory_space<vmem>>, %arg6: memref<64x256xf32, #tpu.memory_space<vmem>>, %arg7: memref<32x256xbf16, #tpu.memory_space<vmem>>, %arg8: memref<1x256xf32, #tpu.memory_space<vmem>>, %arg9: memref<64x64xf32, #tpu.memory_space<vmem>>, %arg10: memref<1x64xf32, #tpu.memory_space<vmem>>, %arg11: memref<64x16xf32, #tpu.memory_space<vmem>>, %arg12: memref<1x16xf32, #tpu.memory_space<vmem>>, %arg13: memref<32x10xf32, #tpu.memory_space<vmem>>, %arg14: memref<1x10xf32, #tpu.memory_space<vmem>>, %arg15: memref<10x2xf32, #tpu.memory_space<vmem>>, %arg16: memref<1x2xf32, #tpu.memory_space<vmem>>, %arg17: memref<2x2xf32, #tpu.memory_space<vmem>>) attributes {dimension_semantics = [], scalar_prefetch = 0 : i64, scratch_operands = 0 : i64, tpu.core_type = #tpu.core_type<tc>} {
    %c0 = arith.constant 0 : index
    %c0_0 = arith.constant 0 : index
    %c0_1 = arith.constant 0 : index
    %0 = vector.load %arg0[%c0, %c0_0, %c0_1] : memref<2x8x32xf32, #tpu.memory_space<vmem>>, vector<2x8x32xf32>
    %1 = vector.shape_cast %0 : vector<2x8x32xf32> to vector<16x32xf32>
    %c0_2 = arith.constant 0 : index
    %c0_3 = arith.constant 0 : index
    %c0_4 = arith.constant 0 : index
    %2 = vector.load %arg1[%c0_2, %c0_3, %c0_4] : memref<2x8x32xf32, #tpu.memory_space<vmem>>, vector<2x8x32xf32>
    %3 = vector.shape_cast %2 : vector<2x8x32xf32> to vector<16x32xf32>
    %4 = tpu.concatenate %1, %3 in 0 : vector<16x32xf32>, vector<16x32xf32> -> vector<32x32xf32>
    %c0_5 = arith.constant 0 : index
    %c0_6 = arith.constant 0 : index
    %5 = vector.load %arg2[%c0_5, %c0_6] : memref<64x32xf32, #tpu.memory_space<vmem>>, vector<64x32xf32>
    %cst = arith.constant dense<0.000000e+00> : vector<64x32xf32>
    %6 = tpu.matmul %5, %4, %cst {dimension_numbers = #tpu.dot_dimension_numbers<[1], [0], [0], [1], [0, 0, 1, 1], [], []>} : vector<64x32xf32>, vector<32x32xf32>, vector<64x32xf32> -> vector<64x32xf32>
    %c0_7 = arith.constant 0 : index
    %c0_8 = arith.constant 0 : index
    %7 = vector.load %arg3[%c0_7, %c0_8] : memref<32x256xf32, #tpu.memory_space<vmem>>, vector<32x256xf32>
    %c0_9 = arith.constant 0 : index
    %c0_10 = arith.constant 0 : index
    %8 = vector.load %arg4[%c0_9, %c0_10] : memref<32x256xbf16, #tpu.memory_space<vmem>>, vector<32x256xbf16>
    %c0_11 = arith.constant 0 : index
    %c0_12 = arith.constant 0 : index
    %9 = vector.load %arg5[%c0_11, %c0_12] : memref<1x256xf32, #tpu.memory_space<vmem>>, vector<1x256xf32>
    %cst_13 = arith.constant dense<0.000000e+00> : vector<64x256xf32>
    %10 = tpu.matmul %6, %7, %cst_13 {dimension_numbers = #tpu.dot_dimension_numbers<[1], [0], [0], [1], [0, 0, 1, 1], [], []>} : vector<64x32xf32>, vector<32x256xf32>, vector<64x256xf32> -> vector<64x256xf32>
    %11 = vector.broadcast %9 : vector<1x256xf32> to vector<64x256xf32>
    %12 = arith.addf %10, %11 : vector<64x256xf32>
    %13 = vector.shape_cast %12 : vector<64x256xf32> to vector<8x8x256xf32>
    %14 = tpu.iota {dimensions = array<i32: 1>} : vector<8x8x128xi32>
    %c4_i32 = arith.constant 4 : i32
    %15 = vector.broadcast %c4_i32 : i32 to vector<8x8x128xi32>
    %16 = arith.cmpi slt, %14, %15 : vector<8x8x128xi32>
    %17 = vector.extract_strided_slice %13 {offsets = [0, 0, 0], sizes = [8, 8, 128], strides = [1, 1, 1]} : vector<8x8x256xf32> to vector<8x8x128xf32>
    %18 = vector.extract_strided_slice %13 {offsets = [0, 0, 128], sizes = [8, 8, 128], strides = [1, 1, 1]} : vector<8x8x256xf32> to vector<8x8x128xf32>
    %19 = arith.select %16, %17, %18 : vector<8x8x128xi1>, vector<8x8x128xf32>
    %20 = tpu.iota {dimensions = array<i32: 0>} : vector<8x128xi32>
    %c4_i32_14 = arith.constant 4 : i32
    %21 = vector.broadcast %c4_i32_14 : i32 to vector<8x128xi32>
    %22 = arith.cmpi slt, %20, %21 : vector<8x128xi32>
    %23 = tpu.iota {dimensions = array<i32: 1>} : vector<8x128xi32>
    %c64_i32 = arith.constant 64 : i32
    %24 = vector.broadcast %c64_i32 : i32 to vector<8x128xi32>
    %25 = arith.cmpi sge, %23, %24 : vector<8x128xi32>
    %c96_i32 = arith.constant 96 : i32
    %26 = vector.broadcast %c96_i32 : i32 to vector<8x128xi32>
    %27 = arith.cmpi slt, %23, %26 : vector<8x128xi32>
    %28 = arith.andi %25, %27 : vector<8x128xi1>
    %cst_15 = arith.constant 0.000000e+00 : f32
    %29 = vector.broadcast %cst_15 : f32 to vector<8x32xf32>
    %cst_16 = arith.constant 0.000000e+00 : f32
    %30 = vector.broadcast %cst_16 : f32 to vector<8x32xf32>
    %31 = arith.truncf %29 : vector<8x32xf32> to vector<8x32xbf16>
    %cst_17 = arith.constant dense<0.000000e+00> : vector<8x256xf32>
    %32 = tpu.matmul %31, %8, %cst_17 {dimension_numbers = #tpu.dot_dimension_numbers<[1], [0], [0], [1], [0, 0, 1, 1], [], []>} : vector<8x32xbf16>, vector<32x256xbf16>, vector<8x256xf32> -> vector<8x256xf32>
    %33 = vector.extract_strided_slice %32 {offsets = [0, 0], sizes = [8, 128], strides = [1, 1]} : vector<8x256xf32> to vector<8x128xf32>
    %34 = vector.extract_strided_slice %32 {offsets = [0, 128], sizes = [8, 128], strides = [1, 1]} : vector<8x256xf32> to vector<8x128xf32>
    %35 = arith.select %22, %33, %34 : vector<8x128xi1>, vector<8x128xf32>
    %36 = vector.extract_strided_slice %19 {offsets = [0, 0, 0], sizes = [1, 8, 128], strides = [1, 1, 1]} : vector<8x8x128xf32> to vector<1x8x128xf32>
    %37 = vector.shape_cast %36 : vector<1x8x128xf32> to vector<8x128xf32>
    %38 = arith.addf %35, %37 : vector<8x128xf32>
    %39 = math.tanh %38 : vector<8x128xf32>
    %40 = arith.negf %38 : vector<8x128xf32>
    %41 = math.exp %40 : vector<8x128xf32>
    %cst_18 = arith.constant 1.000000e+00 : f32
    %42 = vector.broadcast %cst_18 : f32 to vector<8x128xf32>
    %43 = arith.addf %42, %41 : vector<8x128xf32>
    %44 = arith.divf %42, %43 : vector<8x128xf32>
    %45 = arith.select %28, %39, %44 : vector<8x128xi1>, vector<8x128xf32>
    %46 = vector.extract_strided_slice %45 {offsets = [0, 0], sizes = [8, 32], strides = [1, 1]} : vector<8x128xf32> to vector<8x32xf32>
    %47 = vector.extract_strided_slice %45 {offsets = [0, 32], sizes = [8, 32], strides = [1, 1]} : vector<8x128xf32> to vector<8x32xf32>
    %48 = vector.extract_strided_slice %45 {offsets = [0, 64], sizes = [8, 32], strides = [1, 1]} : vector<8x128xf32> to vector<8x32xf32>
    %49 = vector.extract_strided_slice %45 {offsets = [0, 96], sizes = [8, 32], strides = [1, 1]} : vector<8x128xf32> to vector<8x32xf32>
    %50 = arith.mulf %47, %30 : vector<8x32xf32>
    %51 = arith.mulf %46, %48 : vector<8x32xf32>
    %52 = arith.addf %50, %51 : vector<8x32xf32>
    %53 = math.tanh %52 : vector<8x32xf32>
    %54 = arith.mulf %49, %53 : vector<8x32xf32>
    %55 = vector.extract_strided_slice %54 {offsets = [0, 0], sizes = [4, 32], strides = [1, 1]} : vector<8x32xf32> to vector<4x32xf32>
    %56 = vector.extract_strided_slice %54 {offsets = [4, 0], sizes = [4, 32], strides = [1, 1]} : vector<8x32xf32> to vector<4x32xf32>
    %57 = arith.truncf %54 : vector<8x32xf32> to vector<8x32xbf16>
    %cst_19 = arith.constant dense<0.000000e+00> : vector<8x256xf32>
    %58 = tpu.matmul %57, %8, %cst_19 {dimension_numbers = #tpu.dot_dimension_numbers<[1], [0], [0], [1], [0, 0, 1, 1], [], []>} : vector<8x32xbf16>, vector<32x256xbf16>, vector<8x256xf32> -> vector<8x256xf32>
    %59 = vector.extract_strided_slice %58 {offsets = [0, 0], sizes = [8, 128], strides = [1, 1]} : vector<8x256xf32> to vector<8x128xf32>
    %60 = vector.extract_strided_slice %58 {offsets = [0, 128], sizes = [8, 128], strides = [1, 1]} : vector<8x256xf32> to vector<8x128xf32>
    %61 = arith.select %22, %59, %60 : vector<8x128xi1>, vector<8x128xf32>
    %62 = vector.extract_strided_slice %19 {offsets = [1, 0, 0], sizes = [1, 8, 128], strides = [1, 1, 1]} : vector<8x8x128xf32> to vector<1x8x128xf32>
    %63 = vector.shape_cast %62 : vector<1x8x128xf32> to vector<8x128xf32>
    %64 = arith.addf %61, %63 : vector<8x128xf32>
    %65 = math.tanh %64 : vector<8x128xf32>
    %66 = arith.negf %64 : vector<8x128xf32>
    %67 = math.exp %66 : vector<8x128xf32>
    %cst_20 = arith.constant 1.000000e+00 : f32
    %68 = vector.broadcast %cst_20 : f32 to vector<8x128xf32>
    %69 = arith.addf %68, %67 : vector<8x128xf32>
    %70 = arith.divf %68, %69 : vector<8x128xf32>
    %71 = arith.select %28, %65, %70 : vector<8x128xi1>, vector<8x128xf32>
    %72 = vector.extract_strided_slice %71 {offsets = [0, 0], sizes = [8, 32], strides = [1, 1]} : vector<8x128xf32> to vector<8x32xf32>
    %73 = vector.extract_strided_slice %71 {offsets = [0, 32], sizes = [8, 32], strides = [1, 1]} : vector<8x128xf32> to vector<8x32xf32>
    %74 = vector.extract_strided_slice %71 {offsets = [0, 64], sizes = [8, 32], strides = [1, 1]} : vector<8x128xf32> to vector<8x32xf32>
    %75 = vector.extract_strided_slice %71 {offsets = [0, 96], sizes = [8, 32], strides = [1, 1]} : vector<8x128xf32> to vector<8x32xf32>
    %76 = arith.mulf %73, %52 : vector<8x32xf32>
    %77 = arith.mulf %72, %74 : vector<8x32xf32>
    %78 = arith.addf %76, %77 : vector<8x32xf32>
    %79 = math.tanh %78 : vector<8x32xf32>
    %80 = arith.mulf %75, %79 : vector<8x32xf32>
    %81 = vector.extract_strided_slice %80 {offsets = [0, 0], sizes = [4, 32], strides = [1, 1]} : vector<8x32xf32> to vector<4x32xf32>
    %82 = vector.extract_strided_slice %80 {offsets = [4, 0], sizes = [4, 32], strides = [1, 1]} : vector<8x32xf32> to vector<4x32xf32>
    %83 = arith.truncf %80 : vector<8x32xf32> to vector<8x32xbf16>
    %cst_21 = arith.constant dense<0.000000e+00> : vector<8x256xf32>
    %84 = tpu.matmul %83, %8, %cst_21 {dimension_numbers = #tpu.dot_dimension_numbers<[1], [0], [0], [1], [0, 0, 1, 1], [], []>} : vector<8x32xbf16>, vector<32x256xbf16>, vector<8x256xf32> -> vector<8x256xf32>
    %85 = vector.extract_strided_slice %84 {offsets = [0, 0], sizes = [8, 128], strides = [1, 1]} : vector<8x256xf32> to vector<8x128xf32>
    %86 = vector.extract_strided_slice %84 {offsets = [0, 128], sizes = [8, 128], strides = [1, 1]} : vector<8x256xf32> to vector<8x128xf32>
    %87 = arith.select %22, %85, %86 : vector<8x128xi1>, vector<8x128xf32>
    %88 = vector.extract_strided_slice %19 {offsets = [2, 0, 0], sizes = [1, 8, 128], strides = [1, 1, 1]} : vector<8x8x128xf32> to vector<1x8x128xf32>
    %89 = vector.shape_cast %88 : vector<1x8x128xf32> to vector<8x128xf32>
    %90 = arith.addf %87, %89 : vector<8x128xf32>
    %91 = math.tanh %90 : vector<8x128xf32>
    %92 = arith.negf %90 : vector<8x128xf32>
    %93 = math.exp %92 : vector<8x128xf32>
    %cst_22 = arith.constant 1.000000e+00 : f32
    %94 = vector.broadcast %cst_22 : f32 to vector<8x128xf32>
    %95 = arith.addf %94, %93 : vector<8x128xf32>
    %96 = arith.divf %94, %95 : vector<8x128xf32>
    %97 = arith.select %28, %91, %96 : vector<8x128xi1>, vector<8x128xf32>
    %98 = vector.extract_strided_slice %97 {offsets = [0, 0], sizes = [8, 32], strides = [1, 1]} : vector<8x128xf32> to vector<8x32xf32>
    %99 = vector.extract_strided_slice %97 {offsets = [0, 32], sizes = [8, 32], strides = [1, 1]} : vector<8x128xf32> to vector<8x32xf32>
    %100 = vector.extract_strided_slice %97 {offsets = [0, 64], sizes = [8, 32], strides = [1, 1]} : vector<8x128xf32> to vector<8x32xf32>
    %101 = vector.extract_strided_slice %97 {offsets = [0, 96], sizes = [8, 32], strides = [1, 1]} : vector<8x128xf32> to vector<8x32xf32>
    %102 = arith.mulf %99, %78 : vector<8x32xf32>
    %103 = arith.mulf %98, %100 : vector<8x32xf32>
    %104 = arith.addf %102, %103 : vector<8x32xf32>
    %105 = math.tanh %104 : vector<8x32xf32>
    %106 = arith.mulf %101, %105 : vector<8x32xf32>
    %107 = vector.extract_strided_slice %106 {offsets = [0, 0], sizes = [4, 32], strides = [1, 1]} : vector<8x32xf32> to vector<4x32xf32>
    %108 = vector.extract_strided_slice %106 {offsets = [4, 0], sizes = [4, 32], strides = [1, 1]} : vector<8x32xf32> to vector<4x32xf32>
    %109 = arith.truncf %106 : vector<8x32xf32> to vector<8x32xbf16>
    %cst_23 = arith.constant dense<0.000000e+00> : vector<8x256xf32>
    %110 = tpu.matmul %109, %8, %cst_23 {dimension_numbers = #tpu.dot_dimension_numbers<[1], [0], [0], [1], [0, 0, 1, 1], [], []>} : vector<8x32xbf16>, vector<32x256xbf16>, vector<8x256xf32> -> vector<8x256xf32>
    %111 = vector.extract_strided_slice %110 {offsets = [0, 0], sizes = [8, 128], strides = [1, 1]} : vector<8x256xf32> to vector<8x128xf32>
    %112 = vector.extract_strided_slice %110 {offsets = [0, 128], sizes = [8, 128], strides = [1, 1]} : vector<8x256xf32> to vector<8x128xf32>
    %113 = arith.select %22, %111, %112 : vector<8x128xi1>, vector<8x128xf32>
    %114 = vector.extract_strided_slice %19 {offsets = [3, 0, 0], sizes = [1, 8, 128], strides = [1, 1, 1]} : vector<8x8x128xf32> to vector<1x8x128xf32>
    %115 = vector.shape_cast %114 : vector<1x8x128xf32> to vector<8x128xf32>
    %116 = arith.addf %113, %115 : vector<8x128xf32>
    %117 = math.tanh %116 : vector<8x128xf32>
    %118 = arith.negf %116 : vector<8x128xf32>
    %119 = math.exp %118 : vector<8x128xf32>
    %cst_24 = arith.constant 1.000000e+00 : f32
    %120 = vector.broadcast %cst_24 : f32 to vector<8x128xf32>
    %121 = arith.addf %120, %119 : vector<8x128xf32>
    %122 = arith.divf %120, %121 : vector<8x128xf32>
    %123 = arith.select %28, %117, %122 : vector<8x128xi1>, vector<8x128xf32>
    %124 = vector.extract_strided_slice %123 {offsets = [0, 0], sizes = [8, 32], strides = [1, 1]} : vector<8x128xf32> to vector<8x32xf32>
    %125 = vector.extract_strided_slice %123 {offsets = [0, 32], sizes = [8, 32], strides = [1, 1]} : vector<8x128xf32> to vector<8x32xf32>
    %126 = vector.extract_strided_slice %123 {offsets = [0, 64], sizes = [8, 32], strides = [1, 1]} : vector<8x128xf32> to vector<8x32xf32>
    %127 = vector.extract_strided_slice %123 {offsets = [0, 96], sizes = [8, 32], strides = [1, 1]} : vector<8x128xf32> to vector<8x32xf32>
    %128 = arith.mulf %125, %104 : vector<8x32xf32>
    %129 = arith.mulf %124, %126 : vector<8x32xf32>
    %130 = arith.addf %128, %129 : vector<8x32xf32>
    %131 = math.tanh %130 : vector<8x32xf32>
    %132 = arith.mulf %127, %131 : vector<8x32xf32>
    %133 = vector.extract_strided_slice %132 {offsets = [0, 0], sizes = [4, 32], strides = [1, 1]} : vector<8x32xf32> to vector<4x32xf32>
    %134 = vector.extract_strided_slice %132 {offsets = [4, 0], sizes = [4, 32], strides = [1, 1]} : vector<8x32xf32> to vector<4x32xf32>
    %135 = arith.truncf %132 : vector<8x32xf32> to vector<8x32xbf16>
    %cst_25 = arith.constant dense<0.000000e+00> : vector<8x256xf32>
    %136 = tpu.matmul %135, %8, %cst_25 {dimension_numbers = #tpu.dot_dimension_numbers<[1], [0], [0], [1], [0, 0, 1, 1], [], []>} : vector<8x32xbf16>, vector<32x256xbf16>, vector<8x256xf32> -> vector<8x256xf32>
    %137 = vector.extract_strided_slice %136 {offsets = [0, 0], sizes = [8, 128], strides = [1, 1]} : vector<8x256xf32> to vector<8x128xf32>
    %138 = vector.extract_strided_slice %136 {offsets = [0, 128], sizes = [8, 128], strides = [1, 1]} : vector<8x256xf32> to vector<8x128xf32>
    %139 = arith.select %22, %137, %138 : vector<8x128xi1>, vector<8x128xf32>
    %140 = vector.extract_strided_slice %19 {offsets = [4, 0, 0], sizes = [1, 8, 128], strides = [1, 1, 1]} : vector<8x8x128xf32> to vector<1x8x128xf32>
    %141 = vector.shape_cast %140 : vector<1x8x128xf32> to vector<8x128xf32>
    %142 = arith.addf %139, %141 : vector<8x128xf32>
    %143 = math.tanh %142 : vector<8x128xf32>
    %144 = arith.negf %142 : vector<8x128xf32>
    %145 = math.exp %144 : vector<8x128xf32>
    %cst_26 = arith.constant 1.000000e+00 : f32
    %146 = vector.broadcast %cst_26 : f32 to vector<8x128xf32>
    %147 = arith.addf %146, %145 : vector<8x128xf32>
    %148 = arith.divf %146, %147 : vector<8x128xf32>
    %149 = arith.select %28, %143, %148 : vector<8x128xi1>, vector<8x128xf32>
    %150 = vector.extract_strided_slice %149 {offsets = [0, 0], sizes = [8, 32], strides = [1, 1]} : vector<8x128xf32> to vector<8x32xf32>
    %151 = vector.extract_strided_slice %149 {offsets = [0, 32], sizes = [8, 32], strides = [1, 1]} : vector<8x128xf32> to vector<8x32xf32>
    %152 = vector.extract_strided_slice %149 {offsets = [0, 64], sizes = [8, 32], strides = [1, 1]} : vector<8x128xf32> to vector<8x32xf32>
    %153 = vector.extract_strided_slice %149 {offsets = [0, 96], sizes = [8, 32], strides = [1, 1]} : vector<8x128xf32> to vector<8x32xf32>
    %154 = arith.mulf %151, %130 : vector<8x32xf32>
    %155 = arith.mulf %150, %152 : vector<8x32xf32>
    %156 = arith.addf %154, %155 : vector<8x32xf32>
    %157 = math.tanh %156 : vector<8x32xf32>
    %158 = arith.mulf %153, %157 : vector<8x32xf32>
    %159 = vector.extract_strided_slice %158 {offsets = [0, 0], sizes = [4, 32], strides = [1, 1]} : vector<8x32xf32> to vector<4x32xf32>
    %160 = vector.extract_strided_slice %158 {offsets = [4, 0], sizes = [4, 32], strides = [1, 1]} : vector<8x32xf32> to vector<4x32xf32>
    %161 = arith.truncf %158 : vector<8x32xf32> to vector<8x32xbf16>
    %cst_27 = arith.constant dense<0.000000e+00> : vector<8x256xf32>
    %162 = tpu.matmul %161, %8, %cst_27 {dimension_numbers = #tpu.dot_dimension_numbers<[1], [0], [0], [1], [0, 0, 1, 1], [], []>} : vector<8x32xbf16>, vector<32x256xbf16>, vector<8x256xf32> -> vector<8x256xf32>
    %163 = vector.extract_strided_slice %162 {offsets = [0, 0], sizes = [8, 128], strides = [1, 1]} : vector<8x256xf32> to vector<8x128xf32>
    %164 = vector.extract_strided_slice %162 {offsets = [0, 128], sizes = [8, 128], strides = [1, 1]} : vector<8x256xf32> to vector<8x128xf32>
    %165 = arith.select %22, %163, %164 : vector<8x128xi1>, vector<8x128xf32>
    %166 = vector.extract_strided_slice %19 {offsets = [5, 0, 0], sizes = [1, 8, 128], strides = [1, 1, 1]} : vector<8x8x128xf32> to vector<1x8x128xf32>
    %167 = vector.shape_cast %166 : vector<1x8x128xf32> to vector<8x128xf32>
    %168 = arith.addf %165, %167 : vector<8x128xf32>
    %169 = math.tanh %168 : vector<8x128xf32>
    %170 = arith.negf %168 : vector<8x128xf32>
    %171 = math.exp %170 : vector<8x128xf32>
    %cst_28 = arith.constant 1.000000e+00 : f32
    %172 = vector.broadcast %cst_28 : f32 to vector<8x128xf32>
    %173 = arith.addf %172, %171 : vector<8x128xf32>
    %174 = arith.divf %172, %173 : vector<8x128xf32>
    %175 = arith.select %28, %169, %174 : vector<8x128xi1>, vector<8x128xf32>
    %176 = vector.extract_strided_slice %175 {offsets = [0, 0], sizes = [8, 32], strides = [1, 1]} : vector<8x128xf32> to vector<8x32xf32>
    %177 = vector.extract_strided_slice %175 {offsets = [0, 32], sizes = [8, 32], strides = [1, 1]} : vector<8x128xf32> to vector<8x32xf32>
    %178 = vector.extract_strided_slice %175 {offsets = [0, 64], sizes = [8, 32], strides = [1, 1]} : vector<8x128xf32> to vector<8x32xf32>
    %179 = vector.extract_strided_slice %175 {offsets = [0, 96], sizes = [8, 32], strides = [1, 1]} : vector<8x128xf32> to vector<8x32xf32>
    %180 = arith.mulf %177, %156 : vector<8x32xf32>
    %181 = arith.mulf %176, %178 : vector<8x32xf32>
    %182 = arith.addf %180, %181 : vector<8x32xf32>
    %183 = math.tanh %182 : vector<8x32xf32>
    %184 = arith.mulf %179, %183 : vector<8x32xf32>
    %185 = vector.extract_strided_slice %184 {offsets = [0, 0], sizes = [4, 32], strides = [1, 1]} : vector<8x32xf32> to vector<4x32xf32>
    %186 = vector.extract_strided_slice %184 {offsets = [4, 0], sizes = [4, 32], strides = [1, 1]} : vector<8x32xf32> to vector<4x32xf32>
    %187 = arith.truncf %184 : vector<8x32xf32> to vector<8x32xbf16>
    %cst_29 = arith.constant dense<0.000000e+00> : vector<8x256xf32>
    %188 = tpu.matmul %187, %8, %cst_29 {dimension_numbers = #tpu.dot_dimension_numbers<[1], [0], [0], [1], [0, 0, 1, 1], [], []>} : vector<8x32xbf16>, vector<32x256xbf16>, vector<8x256xf32> -> vector<8x256xf32>
    %189 = vector.extract_strided_slice %188 {offsets = [0, 0], sizes = [8, 128], strides = [1, 1]} : vector<8x256xf32> to vector<8x128xf32>
    %190 = vector.extract_strided_slice %188 {offsets = [0, 128], sizes = [8, 128], strides = [1, 1]} : vector<8x256xf32> to vector<8x128xf32>
    %191 = arith.select %22, %189, %190 : vector<8x128xi1>, vector<8x128xf32>
    %192 = vector.extract_strided_slice %19 {offsets = [6, 0, 0], sizes = [1, 8, 128], strides = [1, 1, 1]} : vector<8x8x128xf32> to vector<1x8x128xf32>
    %193 = vector.shape_cast %192 : vector<1x8x128xf32> to vector<8x128xf32>
    %194 = arith.addf %191, %193 : vector<8x128xf32>
    %195 = math.tanh %194 : vector<8x128xf32>
    %196 = arith.negf %194 : vector<8x128xf32>
    %197 = math.exp %196 : vector<8x128xf32>
    %cst_30 = arith.constant 1.000000e+00 : f32
    %198 = vector.broadcast %cst_30 : f32 to vector<8x128xf32>
    %199 = arith.addf %198, %197 : vector<8x128xf32>
    %200 = arith.divf %198, %199 : vector<8x128xf32>
    %201 = arith.select %28, %195, %200 : vector<8x128xi1>, vector<8x128xf32>
    %202 = vector.extract_strided_slice %201 {offsets = [0, 0], sizes = [8, 32], strides = [1, 1]} : vector<8x128xf32> to vector<8x32xf32>
    %203 = vector.extract_strided_slice %201 {offsets = [0, 32], sizes = [8, 32], strides = [1, 1]} : vector<8x128xf32> to vector<8x32xf32>
    %204 = vector.extract_strided_slice %201 {offsets = [0, 64], sizes = [8, 32], strides = [1, 1]} : vector<8x128xf32> to vector<8x32xf32>
    %205 = vector.extract_strided_slice %201 {offsets = [0, 96], sizes = [8, 32], strides = [1, 1]} : vector<8x128xf32> to vector<8x32xf32>
    %206 = arith.mulf %203, %182 : vector<8x32xf32>
    %207 = arith.mulf %202, %204 : vector<8x32xf32>
    %208 = arith.addf %206, %207 : vector<8x32xf32>
    %209 = math.tanh %208 : vector<8x32xf32>
    %210 = arith.mulf %205, %209 : vector<8x32xf32>
    %211 = vector.extract_strided_slice %210 {offsets = [0, 0], sizes = [4, 32], strides = [1, 1]} : vector<8x32xf32> to vector<4x32xf32>
    %212 = vector.extract_strided_slice %210 {offsets = [4, 0], sizes = [4, 32], strides = [1, 1]} : vector<8x32xf32> to vector<4x32xf32>
    %213 = arith.truncf %210 : vector<8x32xf32> to vector<8x32xbf16>
    %cst_31 = arith.constant dense<0.000000e+00> : vector<8x256xf32>
    %214 = tpu.matmul %213, %8, %cst_31 {dimension_numbers = #tpu.dot_dimension_numbers<[1], [0], [0], [1], [0, 0, 1, 1], [], []>} : vector<8x32xbf16>, vector<32x256xbf16>, vector<8x256xf32> -> vector<8x256xf32>
    %215 = vector.extract_strided_slice %214 {offsets = [0, 0], sizes = [8, 128], strides = [1, 1]} : vector<8x256xf32> to vector<8x128xf32>
    %216 = vector.extract_strided_slice %214 {offsets = [0, 128], sizes = [8, 128], strides = [1, 1]} : vector<8x256xf32> to vector<8x128xf32>
    %217 = arith.select %22, %215, %216 : vector<8x128xi1>, vector<8x128xf32>
    %218 = vector.extract_strided_slice %19 {offsets = [7, 0, 0], sizes = [1, 8, 128], strides = [1, 1, 1]} : vector<8x8x128xf32> to vector<1x8x128xf32>
    %219 = vector.shape_cast %218 : vector<1x8x128xf32> to vector<8x128xf32>
    %220 = arith.addf %217, %219 : vector<8x128xf32>
    %221 = math.tanh %220 : vector<8x128xf32>
    %222 = arith.negf %220 : vector<8x128xf32>
    %223 = math.exp %222 : vector<8x128xf32>
    %cst_32 = arith.constant 1.000000e+00 : f32
    %224 = vector.broadcast %cst_32 : f32 to vector<8x128xf32>
    %225 = arith.addf %224, %223 : vector<8x128xf32>
    %226 = arith.divf %224, %225 : vector<8x128xf32>
    %227 = arith.select %28, %221, %226 : vector<8x128xi1>, vector<8x128xf32>
    %228 = vector.extract_strided_slice %227 {offsets = [0, 0], sizes = [8, 32], strides = [1, 1]} : vector<8x128xf32> to vector<8x32xf32>
    %229 = vector.extract_strided_slice %227 {offsets = [0, 32], sizes = [8, 32], strides = [1, 1]} : vector<8x128xf32> to vector<8x32xf32>
    %230 = vector.extract_strided_slice %227 {offsets = [0, 64], sizes = [8, 32], strides = [1, 1]} : vector<8x128xf32> to vector<8x32xf32>
    %231 = vector.extract_strided_slice %227 {offsets = [0, 96], sizes = [8, 32], strides = [1, 1]} : vector<8x128xf32> to vector<8x32xf32>
    %232 = arith.mulf %229, %208 : vector<8x32xf32>
    %233 = arith.mulf %228, %230 : vector<8x32xf32>
    %234 = arith.addf %232, %233 : vector<8x32xf32>
    %235 = math.tanh %234 : vector<8x32xf32>
    %236 = arith.mulf %231, %235 : vector<8x32xf32>
    %237 = vector.extract_strided_slice %236 {offsets = [0, 0], sizes = [4, 32], strides = [1, 1]} : vector<8x32xf32> to vector<4x32xf32>
    %238 = vector.extract_strided_slice %236 {offsets = [4, 0], sizes = [4, 32], strides = [1, 1]} : vector<8x32xf32> to vector<4x32xf32>
    %239 = tpu.concatenate %55, %238 in 1 : vector<4x32xf32>, vector<4x32xf32> -> vector<4x64xf32>
    %240 = tpu.concatenate %81, %212 in 1 : vector<4x32xf32>, vector<4x32xf32> -> vector<4x64xf32>
    %241 = tpu.concatenate %107, %186 in 1 : vector<4x32xf32>, vector<4x32xf32> -> vector<4x64xf32>
    %242 = tpu.concatenate %133, %160 in 1 : vector<4x32xf32>, vector<4x32xf32> -> vector<4x64xf32>
    %243 = tpu.concatenate %159, %134 in 1 : vector<4x32xf32>, vector<4x32xf32> -> vector<4x64xf32>
    %244 = tpu.concatenate %185, %108 in 1 : vector<4x32xf32>, vector<4x32xf32> -> vector<4x64xf32>
    %245 = tpu.concatenate %211, %82 in 1 : vector<4x32xf32>, vector<4x32xf32> -> vector<4x64xf32>
    %246 = tpu.concatenate %237, %56 in 1 : vector<4x32xf32>, vector<4x32xf32> -> vector<4x64xf32>
    %247 = tpu.concatenate %239, %246, %240, %245, %241, %244, %242, %243, %243, %242, %244, %241, %245, %240, %246, %239 in 0 : vector<4x64xf32>, vector<4x64xf32>, vector<4x64xf32>, vector<4x64xf32>, vector<4x64xf32>, vector<4x64xf32>, vector<4x64xf32>, vector<4x64xf32>, vector<4x64xf32>, vector<4x64xf32>, vector<4x64xf32>, vector<4x64xf32>, vector<4x64xf32>, vector<4x64xf32>, vector<4x64xf32>, vector<4x64xf32> -> vector<64x64xf32>
    %c0_33 = arith.constant 0 : index
    %c0_34 = arith.constant 0 : index
    %248 = vector.load %arg6[%c0_33, %c0_34] : memref<64x256xf32, #tpu.memory_space<vmem>>, vector<64x256xf32>
    %c0_35 = arith.constant 0 : index
    %c0_36 = arith.constant 0 : index
    %249 = vector.load %arg7[%c0_35, %c0_36] : memref<32x256xbf16, #tpu.memory_space<vmem>>, vector<32x256xbf16>
    %c0_37 = arith.constant 0 : index
    %c0_38 = arith.constant 0 : index
    %250 = vector.load %arg8[%c0_37, %c0_38] : memref<1x256xf32, #tpu.memory_space<vmem>>, vector<1x256xf32>
    %cst_39 = arith.constant dense<0.000000e+00> : vector<64x256xf32>
    %251 = tpu.matmul %247, %248, %cst_39 {dimension_numbers = #tpu.dot_dimension_numbers<[1], [0], [0], [1], [0, 0, 1, 1], [], []>} : vector<64x64xf32>, vector<64x256xf32>, vector<64x256xf32> -> vector<64x256xf32>
    %252 = vector.broadcast %250 : vector<1x256xf32> to vector<64x256xf32>
    %253 = arith.addf %251, %252 : vector<64x256xf32>
    %254 = vector.shape_cast %253 : vector<64x256xf32> to vector<8x8x256xf32>
    %255 = tpu.iota {dimensions = array<i32: 1>} : vector<8x8x128xi32>
    %c4_i32_40 = arith.constant 4 : i32
    %256 = vector.broadcast %c4_i32_40 : i32 to vector<8x8x128xi32>
    %257 = arith.cmpi slt, %255, %256 : vector<8x8x128xi32>
    %258 = vector.extract_strided_slice %254 {offsets = [0, 0, 0], sizes = [8, 8, 128], strides = [1, 1, 1]} : vector<8x8x256xf32> to vector<8x8x128xf32>
    %259 = vector.extract_strided_slice %254 {offsets = [0, 0, 128], sizes = [8, 8, 128], strides = [1, 1, 1]} : vector<8x8x256xf32> to vector<8x8x128xf32>
    %260 = arith.select %257, %258, %259 : vector<8x8x128xi1>, vector<8x8x128xf32>
    %261 = tpu.iota {dimensions = array<i32: 0>} : vector<8x128xi32>
    %c4_i32_41 = arith.constant 4 : i32
    %262 = vector.broadcast %c4_i32_41 : i32 to vector<8x128xi32>
    %263 = arith.cmpi slt, %261, %262 : vector<8x128xi32>
    %264 = tpu.iota {dimensions = array<i32: 1>} : vector<8x128xi32>
    %c64_i32_42 = arith.constant 64 : i32
    %265 = vector.broadcast %c64_i32_42 : i32 to vector<8x128xi32>
    %266 = arith.cmpi sge, %264, %265 : vector<8x128xi32>
    %c96_i32_43 = arith.constant 96 : i32
    %267 = vector.broadcast %c96_i32_43 : i32 to vector<8x128xi32>
    %268 = arith.cmpi slt, %264, %267 : vector<8x128xi32>
    %269 = arith.andi %266, %268 : vector<8x128xi1>
    %cst_44 = arith.constant 0.000000e+00 : f32
    %270 = vector.broadcast %cst_44 : f32 to vector<8x32xf32>
    %cst_45 = arith.constant 0.000000e+00 : f32
    %271 = vector.broadcast %cst_45 : f32 to vector<8x32xf32>
    %272 = arith.truncf %270 : vector<8x32xf32> to vector<8x32xbf16>
    %cst_46 = arith.constant dense<0.000000e+00> : vector<8x256xf32>
    %273 = tpu.matmul %272, %249, %cst_46 {dimension_numbers = #tpu.dot_dimension_numbers<[1], [0], [0], [1], [0, 0, 1, 1], [], []>} : vector<8x32xbf16>, vector<32x256xbf16>, vector<8x256xf32> -> vector<8x256xf32>
    %274 = vector.extract_strided_slice %273 {offsets = [0, 0], sizes = [8, 128], strides = [1, 1]} : vector<8x256xf32> to vector<8x128xf32>
    %275 = vector.extract_strided_slice %273 {offsets = [0, 128], sizes = [8, 128], strides = [1, 1]} : vector<8x256xf32> to vector<8x128xf32>
    %276 = arith.select %263, %274, %275 : vector<8x128xi1>, vector<8x128xf32>
    %277 = vector.extract_strided_slice %260 {offsets = [0, 0, 0], sizes = [1, 8, 128], strides = [1, 1, 1]} : vector<8x8x128xf32> to vector<1x8x128xf32>
    %278 = vector.shape_cast %277 : vector<1x8x128xf32> to vector<8x128xf32>
    %279 = arith.addf %276, %278 : vector<8x128xf32>
    %280 = math.tanh %279 : vector<8x128xf32>
    %281 = arith.negf %279 : vector<8x128xf32>
    %282 = math.exp %281 : vector<8x128xf32>
    %cst_47 = arith.constant 1.000000e+00 : f32
    %283 = vector.broadcast %cst_47 : f32 to vector<8x128xf32>
    %284 = arith.addf %283, %282 : vector<8x128xf32>
    %285 = arith.divf %283, %284 : vector<8x128xf32>
    %286 = arith.select %269, %280, %285 : vector<8x128xi1>, vector<8x128xf32>
    %287 = vector.extract_strided_slice %286 {offsets = [0, 0], sizes = [8, 32], strides = [1, 1]} : vector<8x128xf32> to vector<8x32xf32>
    %288 = vector.extract_strided_slice %286 {offsets = [0, 32], sizes = [8, 32], strides = [1, 1]} : vector<8x128xf32> to vector<8x32xf32>
    %289 = vector.extract_strided_slice %286 {offsets = [0, 64], sizes = [8, 32], strides = [1, 1]} : vector<8x128xf32> to vector<8x32xf32>
    %290 = vector.extract_strided_slice %286 {offsets = [0, 96], sizes = [8, 32], strides = [1, 1]} : vector<8x128xf32> to vector<8x32xf32>
    %291 = arith.mulf %288, %271 : vector<8x32xf32>
    %292 = arith.mulf %287, %289 : vector<8x32xf32>
    %293 = arith.addf %291, %292 : vector<8x32xf32>
    %294 = math.tanh %293 : vector<8x32xf32>
    %295 = arith.mulf %290, %294 : vector<8x32xf32>
    %296 = arith.truncf %295 : vector<8x32xf32> to vector<8x32xbf16>
    %cst_48 = arith.constant dense<0.000000e+00> : vector<8x256xf32>
    %297 = tpu.matmul %296, %249, %cst_48 {dimension_numbers = #tpu.dot_dimension_numbers<[1], [0], [0], [1], [0, 0, 1, 1], [], []>} : vector<8x32xbf16>, vector<32x256xbf16>, vector<8x256xf32> -> vector<8x256xf32>
    %298 = vector.extract_strided_slice %297 {offsets = [0, 0], sizes = [8, 128], strides = [1, 1]} : vector<8x256xf32> to vector<8x128xf32>
    %299 = vector.extract_strided_slice %297 {offsets = [0, 128], sizes = [8, 128], strides = [1, 1]} : vector<8x256xf32> to vector<8x128xf32>
    %300 = arith.select %263, %298, %299 : vector<8x128xi1>, vector<8x128xf32>
    %301 = vector.extract_strided_slice %260 {offsets = [1, 0, 0], sizes = [1, 8, 128], strides = [1, 1, 1]} : vector<8x8x128xf32> to vector<1x8x128xf32>
    %302 = vector.shape_cast %301 : vector<1x8x128xf32> to vector<8x128xf32>
    %303 = arith.addf %300, %302 : vector<8x128xf32>
    %304 = math.tanh %303 : vector<8x128xf32>
    %305 = arith.negf %303 : vector<8x128xf32>
    %306 = math.exp %305 : vector<8x128xf32>
    %cst_49 = arith.constant 1.000000e+00 : f32
    %307 = vector.broadcast %cst_49 : f32 to vector<8x128xf32>
    %308 = arith.addf %307, %306 : vector<8x128xf32>
    %309 = arith.divf %307, %308 : vector<8x128xf32>
    %310 = arith.select %269, %304, %309 : vector<8x128xi1>, vector<8x128xf32>
    %311 = vector.extract_strided_slice %310 {offsets = [0, 0], sizes = [8, 32], strides = [1, 1]} : vector<8x128xf32> to vector<8x32xf32>
    %312 = vector.extract_strided_slice %310 {offsets = [0, 32], sizes = [8, 32], strides = [1, 1]} : vector<8x128xf32> to vector<8x32xf32>
    %313 = vector.extract_strided_slice %310 {offsets = [0, 64], sizes = [8, 32], strides = [1, 1]} : vector<8x128xf32> to vector<8x32xf32>
    %314 = vector.extract_strided_slice %310 {offsets = [0, 96], sizes = [8, 32], strides = [1, 1]} : vector<8x128xf32> to vector<8x32xf32>
    %315 = arith.mulf %312, %293 : vector<8x32xf32>
    %316 = arith.mulf %311, %313 : vector<8x32xf32>
    %317 = arith.addf %315, %316 : vector<8x32xf32>
    %318 = math.tanh %317 : vector<8x32xf32>
    %319 = arith.mulf %314, %318 : vector<8x32xf32>
    %320 = arith.truncf %319 : vector<8x32xf32> to vector<8x32xbf16>
    %cst_50 = arith.constant dense<0.000000e+00> : vector<8x256xf32>
    %321 = tpu.matmul %320, %249, %cst_50 {dimension_numbers = #tpu.dot_dimension_numbers<[1], [0], [0], [1], [0, 0, 1, 1], [], []>} : vector<8x32xbf16>, vector<32x256xbf16>, vector<8x256xf32> -> vector<8x256xf32>
    %322 = vector.extract_strided_slice %321 {offsets = [0, 0], sizes = [8, 128], strides = [1, 1]} : vector<8x256xf32> to vector<8x128xf32>
    %323 = vector.extract_strided_slice %321 {offsets = [0, 128], sizes = [8, 128], strides = [1, 1]} : vector<8x256xf32> to vector<8x128xf32>
    %324 = arith.select %263, %322, %323 : vector<8x128xi1>, vector<8x128xf32>
    %325 = vector.extract_strided_slice %260 {offsets = [2, 0, 0], sizes = [1, 8, 128], strides = [1, 1, 1]} : vector<8x8x128xf32> to vector<1x8x128xf32>
    %326 = vector.shape_cast %325 : vector<1x8x128xf32> to vector<8x128xf32>
    %327 = arith.addf %324, %326 : vector<8x128xf32>
    %328 = math.tanh %327 : vector<8x128xf32>
    %329 = arith.negf %327 : vector<8x128xf32>
    %330 = math.exp %329 : vector<8x128xf32>
    %cst_51 = arith.constant 1.000000e+00 : f32
    %331 = vector.broadcast %cst_51 : f32 to vector<8x128xf32>
    %332 = arith.addf %331, %330 : vector<8x128xf32>
    %333 = arith.divf %331, %332 : vector<8x128xf32>
    %334 = arith.select %269, %328, %333 : vector<8x128xi1>, vector<8x128xf32>
    %335 = vector.extract_strided_slice %334 {offsets = [0, 0], sizes = [8, 32], strides = [1, 1]} : vector<8x128xf32> to vector<8x32xf32>
    %336 = vector.extract_strided_slice %334 {offsets = [0, 32], sizes = [8, 32], strides = [1, 1]} : vector<8x128xf32> to vector<8x32xf32>
    %337 = vector.extract_strided_slice %334 {offsets = [0, 64], sizes = [8, 32], strides = [1, 1]} : vector<8x128xf32> to vector<8x32xf32>
    %338 = vector.extract_strided_slice %334 {offsets = [0, 96], sizes = [8, 32], strides = [1, 1]} : vector<8x128xf32> to vector<8x32xf32>
    %339 = arith.mulf %336, %317 : vector<8x32xf32>
    %340 = arith.mulf %335, %337 : vector<8x32xf32>
    %341 = arith.addf %339, %340 : vector<8x32xf32>
    %342 = math.tanh %341 : vector<8x32xf32>
    %343 = arith.mulf %338, %342 : vector<8x32xf32>
    %344 = arith.truncf %343 : vector<8x32xf32> to vector<8x32xbf16>
    %cst_52 = arith.constant dense<0.000000e+00> : vector<8x256xf32>
    %345 = tpu.matmul %344, %249, %cst_52 {dimension_numbers = #tpu.dot_dimension_numbers<[1], [0], [0], [1], [0, 0, 1, 1], [], []>} : vector<8x32xbf16>, vector<32x256xbf16>, vector<8x256xf32> -> vector<8x256xf32>
    %346 = vector.extract_strided_slice %345 {offsets = [0, 0], sizes = [8, 128], strides = [1, 1]} : vector<8x256xf32> to vector<8x128xf32>
    %347 = vector.extract_strided_slice %345 {offsets = [0, 128], sizes = [8, 128], strides = [1, 1]} : vector<8x256xf32> to vector<8x128xf32>
    %348 = arith.select %263, %346, %347 : vector<8x128xi1>, vector<8x128xf32>
    %349 = vector.extract_strided_slice %260 {offsets = [3, 0, 0], sizes = [1, 8, 128], strides = [1, 1, 1]} : vector<8x8x128xf32> to vector<1x8x128xf32>
    %350 = vector.shape_cast %349 : vector<1x8x128xf32> to vector<8x128xf32>
    %351 = arith.addf %348, %350 : vector<8x128xf32>
    %352 = math.tanh %351 : vector<8x128xf32>
    %353 = arith.negf %351 : vector<8x128xf32>
    %354 = math.exp %353 : vector<8x128xf32>
    %cst_53 = arith.constant 1.000000e+00 : f32
    %355 = vector.broadcast %cst_53 : f32 to vector<8x128xf32>
    %356 = arith.addf %355, %354 : vector<8x128xf32>
    %357 = arith.divf %355, %356 : vector<8x128xf32>
    %358 = arith.select %269, %352, %357 : vector<8x128xi1>, vector<8x128xf32>
    %359 = vector.extract_strided_slice %358 {offsets = [0, 0], sizes = [8, 32], strides = [1, 1]} : vector<8x128xf32> to vector<8x32xf32>
    %360 = vector.extract_strided_slice %358 {offsets = [0, 32], sizes = [8, 32], strides = [1, 1]} : vector<8x128xf32> to vector<8x32xf32>
    %361 = vector.extract_strided_slice %358 {offsets = [0, 64], sizes = [8, 32], strides = [1, 1]} : vector<8x128xf32> to vector<8x32xf32>
    %362 = vector.extract_strided_slice %358 {offsets = [0, 96], sizes = [8, 32], strides = [1, 1]} : vector<8x128xf32> to vector<8x32xf32>
    %363 = arith.mulf %360, %341 : vector<8x32xf32>
    %364 = arith.mulf %359, %361 : vector<8x32xf32>
    %365 = arith.addf %363, %364 : vector<8x32xf32>
    %366 = math.tanh %365 : vector<8x32xf32>
    %367 = arith.mulf %362, %366 : vector<8x32xf32>
    %368 = arith.truncf %367 : vector<8x32xf32> to vector<8x32xbf16>
    %cst_54 = arith.constant dense<0.000000e+00> : vector<8x256xf32>
    %369 = tpu.matmul %368, %249, %cst_54 {dimension_numbers = #tpu.dot_dimension_numbers<[1], [0], [0], [1], [0, 0, 1, 1], [], []>} : vector<8x32xbf16>, vector<32x256xbf16>, vector<8x256xf32> -> vector<8x256xf32>
    %370 = vector.extract_strided_slice %369 {offsets = [0, 0], sizes = [8, 128], strides = [1, 1]} : vector<8x256xf32> to vector<8x128xf32>
    %371 = vector.extract_strided_slice %369 {offsets = [0, 128], sizes = [8, 128], strides = [1, 1]} : vector<8x256xf32> to vector<8x128xf32>
    %372 = arith.select %263, %370, %371 : vector<8x128xi1>, vector<8x128xf32>
    %373 = vector.extract_strided_slice %260 {offsets = [4, 0, 0], sizes = [1, 8, 128], strides = [1, 1, 1]} : vector<8x8x128xf32> to vector<1x8x128xf32>
    %374 = vector.shape_cast %373 : vector<1x8x128xf32> to vector<8x128xf32>
    %375 = arith.addf %372, %374 : vector<8x128xf32>
    %376 = math.tanh %375 : vector<8x128xf32>
    %377 = arith.negf %375 : vector<8x128xf32>
    %378 = math.exp %377 : vector<8x128xf32>
    %cst_55 = arith.constant 1.000000e+00 : f32
    %379 = vector.broadcast %cst_55 : f32 to vector<8x128xf32>
    %380 = arith.addf %379, %378 : vector<8x128xf32>
    %381 = arith.divf %379, %380 : vector<8x128xf32>
    %382 = arith.select %269, %376, %381 : vector<8x128xi1>, vector<8x128xf32>
    %383 = vector.extract_strided_slice %382 {offsets = [0, 0], sizes = [8, 32], strides = [1, 1]} : vector<8x128xf32> to vector<8x32xf32>
    %384 = vector.extract_strided_slice %382 {offsets = [0, 32], sizes = [8, 32], strides = [1, 1]} : vector<8x128xf32> to vector<8x32xf32>
    %385 = vector.extract_strided_slice %382 {offsets = [0, 64], sizes = [8, 32], strides = [1, 1]} : vector<8x128xf32> to vector<8x32xf32>
    %386 = vector.extract_strided_slice %382 {offsets = [0, 96], sizes = [8, 32], strides = [1, 1]} : vector<8x128xf32> to vector<8x32xf32>
    %387 = arith.mulf %384, %365 : vector<8x32xf32>
    %388 = arith.mulf %383, %385 : vector<8x32xf32>
    %389 = arith.addf %387, %388 : vector<8x32xf32>
    %390 = math.tanh %389 : vector<8x32xf32>
    %391 = arith.mulf %386, %390 : vector<8x32xf32>
    %392 = arith.truncf %391 : vector<8x32xf32> to vector<8x32xbf16>
    %cst_56 = arith.constant dense<0.000000e+00> : vector<8x256xf32>
    %393 = tpu.matmul %392, %249, %cst_56 {dimension_numbers = #tpu.dot_dimension_numbers<[1], [0], [0], [1], [0, 0, 1, 1], [], []>} : vector<8x32xbf16>, vector<32x256xbf16>, vector<8x256xf32> -> vector<8x256xf32>
    %394 = vector.extract_strided_slice %393 {offsets = [0, 0], sizes = [8, 128], strides = [1, 1]} : vector<8x256xf32> to vector<8x128xf32>
    %395 = vector.extract_strided_slice %393 {offsets = [0, 128], sizes = [8, 128], strides = [1, 1]} : vector<8x256xf32> to vector<8x128xf32>
    %396 = arith.select %263, %394, %395 : vector<8x128xi1>, vector<8x128xf32>
    %397 = vector.extract_strided_slice %260 {offsets = [5, 0, 0], sizes = [1, 8, 128], strides = [1, 1, 1]} : vector<8x8x128xf32> to vector<1x8x128xf32>
    %398 = vector.shape_cast %397 : vector<1x8x128xf32> to vector<8x128xf32>
    %399 = arith.addf %396, %398 : vector<8x128xf32>
    %400 = math.tanh %399 : vector<8x128xf32>
    %401 = arith.negf %399 : vector<8x128xf32>
    %402 = math.exp %401 : vector<8x128xf32>
    %cst_57 = arith.constant 1.000000e+00 : f32
    %403 = vector.broadcast %cst_57 : f32 to vector<8x128xf32>
    %404 = arith.addf %403, %402 : vector<8x128xf32>
    %405 = arith.divf %403, %404 : vector<8x128xf32>
    %406 = arith.select %269, %400, %405 : vector<8x128xi1>, vector<8x128xf32>
    %407 = vector.extract_strided_slice %406 {offsets = [0, 0], sizes = [8, 32], strides = [1, 1]} : vector<8x128xf32> to vector<8x32xf32>
    %408 = vector.extract_strided_slice %406 {offsets = [0, 32], sizes = [8, 32], strides = [1, 1]} : vector<8x128xf32> to vector<8x32xf32>
    %409 = vector.extract_strided_slice %406 {offsets = [0, 64], sizes = [8, 32], strides = [1, 1]} : vector<8x128xf32> to vector<8x32xf32>
    %410 = vector.extract_strided_slice %406 {offsets = [0, 96], sizes = [8, 32], strides = [1, 1]} : vector<8x128xf32> to vector<8x32xf32>
    %411 = arith.mulf %408, %389 : vector<8x32xf32>
    %412 = arith.mulf %407, %409 : vector<8x32xf32>
    %413 = arith.addf %411, %412 : vector<8x32xf32>
    %414 = math.tanh %413 : vector<8x32xf32>
    %415 = arith.mulf %410, %414 : vector<8x32xf32>
    %416 = arith.truncf %415 : vector<8x32xf32> to vector<8x32xbf16>
    %cst_58 = arith.constant dense<0.000000e+00> : vector<8x256xf32>
    %417 = tpu.matmul %416, %249, %cst_58 {dimension_numbers = #tpu.dot_dimension_numbers<[1], [0], [0], [1], [0, 0, 1, 1], [], []>} : vector<8x32xbf16>, vector<32x256xbf16>, vector<8x256xf32> -> vector<8x256xf32>
    %418 = vector.extract_strided_slice %417 {offsets = [0, 0], sizes = [8, 128], strides = [1, 1]} : vector<8x256xf32> to vector<8x128xf32>
    %419 = vector.extract_strided_slice %417 {offsets = [0, 128], sizes = [8, 128], strides = [1, 1]} : vector<8x256xf32> to vector<8x128xf32>
    %420 = arith.select %263, %418, %419 : vector<8x128xi1>, vector<8x128xf32>
    %421 = vector.extract_strided_slice %260 {offsets = [6, 0, 0], sizes = [1, 8, 128], strides = [1, 1, 1]} : vector<8x8x128xf32> to vector<1x8x128xf32>
    %422 = vector.shape_cast %421 : vector<1x8x128xf32> to vector<8x128xf32>
    %423 = arith.addf %420, %422 : vector<8x128xf32>
    %424 = math.tanh %423 : vector<8x128xf32>
    %425 = arith.negf %423 : vector<8x128xf32>
    %426 = math.exp %425 : vector<8x128xf32>
    %cst_59 = arith.constant 1.000000e+00 : f32
    %427 = vector.broadcast %cst_59 : f32 to vector<8x128xf32>
    %428 = arith.addf %427, %426 : vector<8x128xf32>
    %429 = arith.divf %427, %428 : vector<8x128xf32>
    %430 = arith.select %269, %424, %429 : vector<8x128xi1>, vector<8x128xf32>
    %431 = vector.extract_strided_slice %430 {offsets = [0, 0], sizes = [8, 32], strides = [1, 1]} : vector<8x128xf32> to vector<8x32xf32>
    %432 = vector.extract_strided_slice %430 {offsets = [0, 32], sizes = [8, 32], strides = [1, 1]} : vector<8x128xf32> to vector<8x32xf32>
    %433 = vector.extract_strided_slice %430 {offsets = [0, 64], sizes = [8, 32], strides = [1, 1]} : vector<8x128xf32> to vector<8x32xf32>
    %434 = vector.extract_strided_slice %430 {offsets = [0, 96], sizes = [8, 32], strides = [1, 1]} : vector<8x128xf32> to vector<8x32xf32>
    %435 = arith.mulf %432, %413 : vector<8x32xf32>
    %436 = arith.mulf %431, %433 : vector<8x32xf32>
    %437 = arith.addf %435, %436 : vector<8x32xf32>
    %438 = math.tanh %437 : vector<8x32xf32>
    %439 = arith.mulf %434, %438 : vector<8x32xf32>
    %440 = arith.truncf %439 : vector<8x32xf32> to vector<8x32xbf16>
    %cst_60 = arith.constant dense<0.000000e+00> : vector<8x256xf32>
    %441 = tpu.matmul %440, %249, %cst_60 {dimension_numbers = #tpu.dot_dimension_numbers<[1], [0], [0], [1], [0, 0, 1, 1], [], []>} : vector<8x32xbf16>, vector<32x256xbf16>, vector<8x256xf32> -> vector<8x256xf32>
    %442 = vector.extract_strided_slice %441 {offsets = [0, 0], sizes = [8, 128], strides = [1, 1]} : vector<8x256xf32> to vector<8x128xf32>
    %443 = vector.extract_strided_slice %441 {offsets = [0, 128], sizes = [8, 128], strides = [1, 1]} : vector<8x256xf32> to vector<8x128xf32>
    %444 = arith.select %263, %442, %443 : vector<8x128xi1>, vector<8x128xf32>
    %445 = vector.extract_strided_slice %260 {offsets = [7, 0, 0], sizes = [1, 8, 128], strides = [1, 1, 1]} : vector<8x8x128xf32> to vector<1x8x128xf32>
    %446 = vector.shape_cast %445 : vector<1x8x128xf32> to vector<8x128xf32>
    %447 = arith.addf %444, %446 : vector<8x128xf32>
    %448 = math.tanh %447 : vector<8x128xf32>
    %449 = arith.negf %447 : vector<8x128xf32>
    %450 = math.exp %449 : vector<8x128xf32>
    %cst_61 = arith.constant 1.000000e+00 : f32
    %451 = vector.broadcast %cst_61 : f32 to vector<8x128xf32>
    %452 = arith.addf %451, %450 : vector<8x128xf32>
    %453 = arith.divf %451, %452 : vector<8x128xf32>
    %454 = arith.select %269, %448, %453 : vector<8x128xi1>, vector<8x128xf32>
    %455 = vector.extract_strided_slice %454 {offsets = [0, 0], sizes = [8, 32], strides = [1, 1]} : vector<8x128xf32> to vector<8x32xf32>
    %456 = vector.extract_strided_slice %454 {offsets = [0, 32], sizes = [8, 32], strides = [1, 1]} : vector<8x128xf32> to vector<8x32xf32>
    %457 = vector.extract_strided_slice %454 {offsets = [0, 64], sizes = [8, 32], strides = [1, 1]} : vector<8x128xf32> to vector<8x32xf32>
    %458 = vector.extract_strided_slice %454 {offsets = [0, 96], sizes = [8, 32], strides = [1, 1]} : vector<8x128xf32> to vector<8x32xf32>
    %459 = arith.mulf %456, %437 : vector<8x32xf32>
    %460 = arith.mulf %455, %457 : vector<8x32xf32>
    %461 = arith.addf %459, %460 : vector<8x32xf32>
    %462 = math.tanh %461 : vector<8x32xf32>
    %463 = arith.mulf %458, %462 : vector<8x32xf32>
    %464 = vector.extract_strided_slice %463 {offsets = [0, 0], sizes = [4, 32], strides = [1, 1]} : vector<8x32xf32> to vector<4x32xf32>
    %465 = vector.extract_strided_slice %463 {offsets = [4, 0], sizes = [4, 32], strides = [1, 1]} : vector<8x32xf32> to vector<4x32xf32>
    %466 = tpu.concatenate %464, %465 in 1 : vector<4x32xf32>, vector<4x32xf32> -> vector<4x64xf32>
    %c0_62 = arith.constant 0 : index
    %c0_63 = arith.constant 0 : index
    %467 = vector.load %arg9[%c0_62, %c0_63] : memref<64x64xf32, #tpu.memory_space<vmem>>, vector<64x64xf32>
    %cst_64 = arith.constant dense<0.000000e+00> : vector<4x64xf32>
    %468 = tpu.matmul %466, %467, %cst_64 {dimension_numbers = #tpu.dot_dimension_numbers<[1], [0], [0], [1], [0, 0, 1, 1], [], []>} : vector<4x64xf32>, vector<64x64xf32>, vector<4x64xf32> -> vector<4x64xf32>
    %c0_65 = arith.constant 0 : index
    %c0_66 = arith.constant 0 : index
    %469 = vector.load %arg10[%c0_65, %c0_66] : memref<1x64xf32, #tpu.memory_space<vmem>>, vector<1x64xf32>
    %470 = vector.broadcast %469 : vector<1x64xf32> to vector<4x64xf32>
    %471 = arith.addf %468, %470 : vector<4x64xf32>
    %cst_67 = arith.constant 0.000000e+00 : f32
    %472 = vector.broadcast %cst_67 : f32 to vector<4x64xf32>
    %473 = arith.maximumf %471, %472 : vector<4x64xf32>
    %c0_68 = arith.constant 0 : index
    %c0_69 = arith.constant 0 : index
    %474 = vector.load %arg11[%c0_68, %c0_69] : memref<64x16xf32, #tpu.memory_space<vmem>>, vector<64x16xf32>
    %cst_70 = arith.constant dense<0.000000e+00> : vector<4x16xf32>
    %475 = tpu.matmul %473, %474, %cst_70 {dimension_numbers = #tpu.dot_dimension_numbers<[1], [0], [0], [1], [0, 0, 1, 1], [], []>} : vector<4x64xf32>, vector<64x16xf32>, vector<4x16xf32> -> vector<4x16xf32>
    %c0_71 = arith.constant 0 : index
    %c0_72 = arith.constant 0 : index
    %476 = vector.load %arg12[%c0_71, %c0_72] : memref<1x16xf32, #tpu.memory_space<vmem>>, vector<1x16xf32>
    %477 = vector.broadcast %476 : vector<1x16xf32> to vector<4x16xf32>
    %478 = arith.addf %475, %477 : vector<4x16xf32>
    %479 = vector.extract_strided_slice %478 {offsets = [0, 0], sizes = [2, 16], strides = [1, 1]} : vector<4x16xf32> to vector<2x16xf32>
    %480 = vector.extract_strided_slice %478 {offsets = [2, 0], sizes = [2, 16], strides = [1, 1]} : vector<4x16xf32> to vector<2x16xf32>
    %481 = tpu.concatenate %479, %480 in 1 : vector<2x16xf32>, vector<2x16xf32> -> vector<2x32xf32>
    %c0_73 = arith.constant 0 : index
    %c0_74 = arith.constant 0 : index
    %482 = vector.load %arg13[%c0_73, %c0_74] : memref<32x10xf32, #tpu.memory_space<vmem>>, vector<32x10xf32>
    %cst_75 = arith.constant dense<0.000000e+00> : vector<2x10xf32>
    %483 = tpu.matmul %481, %482, %cst_75 {dimension_numbers = #tpu.dot_dimension_numbers<[1], [0], [0], [1], [0, 0, 1, 1], [], []>} : vector<2x32xf32>, vector<32x10xf32>, vector<2x10xf32> -> vector<2x10xf32>
    %c0_76 = arith.constant 0 : index
    %c0_77 = arith.constant 0 : index
    %484 = vector.load %arg14[%c0_76, %c0_77] : memref<1x10xf32, #tpu.memory_space<vmem>>, vector<1x10xf32>
    %485 = vector.broadcast %484 : vector<1x10xf32> to vector<2x10xf32>
    %486 = arith.addf %483, %485 : vector<2x10xf32>
    %cst_78 = arith.constant 0.000000e+00 : f32
    %487 = vector.broadcast %cst_78 : f32 to vector<2x10xf32>
    %488 = arith.maximumf %486, %487 : vector<2x10xf32>
    %c0_79 = arith.constant 0 : index
    %c0_80 = arith.constant 0 : index
    %489 = vector.load %arg15[%c0_79, %c0_80] : memref<10x2xf32, #tpu.memory_space<vmem>>, vector<10x2xf32>
    %cst_81 = arith.constant dense<0.000000e+00> : vector<2x2xf32>
    %490 = tpu.matmul %488, %489, %cst_81 {dimension_numbers = #tpu.dot_dimension_numbers<[1], [0], [0], [1], [0, 0, 1, 1], [], []>} : vector<2x10xf32>, vector<10x2xf32>, vector<2x2xf32> -> vector<2x2xf32>
    %c0_82 = arith.constant 0 : index
    %c0_83 = arith.constant 0 : index
    %491 = vector.load %arg16[%c0_82, %c0_83] : memref<1x2xf32, #tpu.memory_space<vmem>>, vector<1x2xf32>
    %492 = vector.broadcast %491 : vector<1x2xf32> to vector<2x2xf32>
    %493 = arith.addf %490, %492 : vector<2x2xf32>
    %c0_84 = arith.constant 0 : index
    %c0_85 = arith.constant 0 : index
    %494 = vector.load %arg17[%c0_84, %c0_85] : memref<2x2xf32, #tpu.memory_space<vmem>>, vector<2x2xf32>
    tpu.vector_store %arg17[%c0_84, %c0_85], %493 {strides = array<i32>} : memref<2x2xf32, #tpu.memory_space<vmem>>, vector<2x2xf32>,
    return
  }
}

</mosaic_0001>

<llo_original>
// kernel: lstm_forward.1
$region0: #{lstm_forward.1}
  #allocation0 [shape = 'u32[]', space=smem, size = 0x4, offset = 0x4, fixed_abs, tag = 'smem constant byte address 0x4 - core index']
  #allocation1 [shape = 'u32[72,128]{1,0:T(1,128)}', space=vmem, size = 0x9000, scoped, tag = 'internal scratch']
  %s0 = inlined_call_operand.vmem [shape: f32[2,8,32], index: 0, kind: input, shape index: {}]
  %s1 = inlined_call_operand.hbm [shape: f32[2,8,32], index: 1, kind: input, shape index: {}]
  %s2 = inlined_call_operand.hbm [shape: f32[64,32], index: 2, kind: input, shape index: {}]
  %s3 = inlined_call_operand.vmem [shape: f32[32,256], index: 3, kind: input, shape index: {}]
  %s4 = inlined_call_operand.vmem [shape: bf16[32,256], index: 4, kind: input, shape index: {}]
  %s5 = inlined_call_operand.vmem [shape: f32[1,256], index: 5, kind: input, shape index: {}]
  %s6 = inlined_call_operand.hbm [shape: f32[64,256], index: 6, kind: input, shape index: {}]
  %s7 = inlined_call_operand.hbm [shape: bf16[32,256], index: 7, kind: input, shape index: {}]
  %s8 = inlined_call_operand.vmem [shape: f32[1,256], index: 8, kind: input, shape index: {}]
  %s9 = inlined_call_operand.hbm [shape: f32[64,64], index: 9, kind: input, shape index: {}]
  %s10 = inlined_call_operand.vmem [shape: f32[1,64], index: 10, kind: input, shape index: {}]
  %s11 = inlined_call_operand.vmem [shape: f32[64,16], index: 11, kind: input, shape index: {}]
  %s12 = inlined_call_operand.vmem [shape: f32[1,16], index: 12, kind: input, shape index: {}]
  %s13 = inlined_call_operand.vmem [shape: f32[32,10], index: 13, kind: input, shape index: {}]
  %s14 = inlined_call_operand.hbm [shape: f32[1,10], index: 14, kind: input, shape index: {}]
  %s15 = inlined_call_operand.vmem [shape: f32[10,2], index: 15, kind: input, shape index: {}]
  %s16 = inlined_call_operand.vmem [shape: f32[1,2], index: 16, kind: input, shape index: {}]
  %s17 = inlined_call_operand.hbm [shape: f32[2,2], index: 17, kind: output, shape index: {}]
  %s18 = sld [smem:[#allocation0]]
  $region102: #{lstm_forward.1} parent=0
    _
  %s20 = ssub.s32 1, %s18
  %s21 = scalar_select 0, %s20, %s18
  $region1: #{lstm_forward.1} parent=0
    #allocation2 [shape = 'u8[8192]{0}', space=vmem, size = 0x2000, scoped, tag = 'input window, operand 1, single buffered']
    #allocation3 [shape = 's32[1]{0}', space=sflag, size = 0x4, scoped, tag = 'scoped memory for lstm_forward.1']
    #allocation4 [shape = 's32[1]{0}', space=sflag, size = 0x4, scoped, tag = 'scoped memory for lstm_forward.1']
    #allocation5 [shape = 'u8[32768]{0}', space=vmem, size = 0x8000, scoped, tag = 'input window, operand 2, single buffered']
    #allocation6 [shape = 's32[1]{0}', space=sflag, size = 0x4, scoped, tag = 'scoped memory for lstm_forward.1']
    #allocation7 [shape = 'u8[65536]{0}', space=vmem, size = 0x10000, scoped, tag = 'input window, operand 6, single buffered']
    #allocation8 [shape = 'u8[16384]{0}', space=vmem, size = 0x4000, scoped, tag = 'input window, operand 7, single buffered']
    #allocation9 [shape = 's32[1]{0}', space=sflag, size = 0x4, scoped, tag = 'scoped memory for lstm_forward.1']
    #allocation10 [shape = 'u8[32768]{0}', space=vmem, size = 0x8000, scoped, tag = 'input window, operand 9, single buffered']
    #allocation11 [shape = 'u8[512]{0}', space=vmem, size = 0x400, scoped, tag = 'input window, operand 14, single buffered']
    #allocation12 [shape = 's32[1]{0}', space=sflag, size = 0x4, scoped, tag = 'scoped memory for lstm_forward.1']
    #allocation13 [shape = 'u8[1024]{0}', space=vmem, size = 0x400, scoped, tag = 'output window, operand 0, single buffered']
    %22 = vsyncpa [#allocation3], 0
    %23 = vsyncpa [#allocation6], 0
    %24 = vsyncpa [#allocation9], 0
    %25 = vsyncpa [#allocation12], 0
    %26 = vsyncpa [#allocation4], 0
    // Predicated region
    $region2: #{lstm_forward.1} parent=1 // pred_check
      _
    $region3: #{lstm_forward.1} parent=1 // pred_check_branch
      %28 = sbr.rel (0) target = $region5
    $region4: #{lstm_forward.1} parent=1 // pred_region
      _
    $region5: #{lstm_forward.1} parent=1 // pred_fallthru
      _
    // Predicated region
    $region6: #{lstm_forward.1} parent=1 // pred_check
      _
    $region7: #{lstm_forward.1} parent=1 // pred_check_branch
      %30 = sbr.rel (0) target = $region9
    $region8: #{lstm_forward.1} parent=1 // pred_region
      %32 = vsyncadd [#allocation3], 0
      %s33 = sshll.u32 %s1, 4
      %s34 = int_to_ptr.hbm [resolvable:$true] %s33
      %s35 = sshll.u32 [#allocation2], 4
      %s36 = int_to_ptr.vmem [resolvable:$true] %s35
      %41 = dma.hbm_to_vmem [thread:$0]  %s34, 256, %s36, [#allocation3], 128, 128, 8
    $region9: #{lstm_forward.1} parent=1 // pred_fallthru
      _
    // Predicated region
    $region10: #{lstm_forward.1} parent=1 // pred_check
      _
    $region11: #{lstm_forward.1} parent=1 // pred_check_branch
      %43 = sbr.rel (0) target = $region13
    $region12: #{lstm_forward.1} parent=1 // pred_region
      %45 = vsyncadd [#allocation6], 0
      %s46 = sshll.u32 %s2, 4
      %s47 = int_to_ptr.hbm [resolvable:$true] %s46
      %s48 = sshll.u32 [#allocation5], 4
      %s49 = int_to_ptr.vmem [resolvable:$true] %s48
      %54 = dma.hbm_to_vmem [thread:$0]  %s47, 1024, %s49, [#allocation6], 128, 128, 8
    $region13: #{lstm_forward.1} parent=1 // pred_fallthru
      _
    // Predicated region
    $region14: #{lstm_forward.1} parent=1 // pred_check
      _
    $region15: #{lstm_forward.1} parent=1 // pred_check_branch
      %56 = sbr.rel (0) target = $region17
    $region16: #{lstm_forward.1} parent=1 // pred_region
      _
    $region17: #{lstm_forward.1} parent=1 // pred_fallthru
      _
    // Predicated region
    $region18: #{lstm_forward.1} parent=1 // pred_check
      _
    $region19: #{lstm_forward.1} parent=1 // pred_check_branch
      %58 = sbr.rel (0) target = $region21
    $region20: #{lstm_forward.1} parent=1 // pred_region
      _
    $region21: #{lstm_forward.1} parent=1 // pred_fallthru
      _
    // Predicated region
    $region22: #{lstm_forward.1} parent=1 // pred_check
      _
    $region23: #{lstm_forward.1} parent=1 // pred_check_branch
      %60 = sbr.rel (0) target = $region25
    $region24: #{lstm_forward.1} parent=1 // pred_region
      _
    $region25: #{lstm_forward.1} parent=1 // pred_fallthru
      _
    // Predicated region
    $region26: #{lstm_forward.1} parent=1 // pred_check
      _
    $region27: #{lstm_forward.1} parent=1 // pred_check_branch
      %62 = sbr.rel (0) target = $region29
    $region28: #{lstm_forward.1} parent=1 // pred_region
      %64 = vsyncadd [#allocation6], 0
      %s65 = sshll.u32 %s6, 4
      %s66 = int_to_ptr.hbm [resolvable:$true] %s65
      %s67 = sshll.u32 [#allocation7], 4
      %s68 = int_to_ptr.vmem [resolvable:$true] %s67
      %73 = dma.hbm_to_vmem [thread:$0]  %s66, 2048, %s68, [#allocation6], 256, 256, 16
    $region29: #{lstm_forward.1} parent=1 // pred_fallthru
      _
    // Predicated region
    $region30: #{lstm_forward.1} parent=1 // pred_check
      _
    $region31: #{lstm_forward.1} parent=1 // pred_check_branch
      %75 = sbr.rel (0) target = $region33
    $region32: #{lstm_forward.1} parent=1 // pred_region
      %77 = vsyncadd [#allocation9], 0
      %s78 = sshll.u32 %s7, 4
      %s79 = int_to_ptr.hbm [resolvable:$true] %s78
      %s80 = sshll.u32 [#allocation8], 4
      %s81 = int_to_ptr.vmem [resolvable:$true] %s80
      %86 = dma.hbm_to_vmem [thread:$0]  %s79, 512, %s81, [#allocation9], 128, 128, 8
    $region33: #{lstm_forward.1} parent=1 // pred_fallthru
      _
    // Predicated region
    $region34: #{lstm_forward.1} parent=1 // pred_check
      _
    $region35: #{lstm_forward.1} parent=1 // pred_check_branch
      %88 = sbr.rel (0) target = $region37
    $region36: #{lstm_forward.1} parent=1 // pred_region
      _
    $region37: #{lstm_forward.1} parent=1 // pred_fallthru
      _
    // Predicated region
    $region38: #{lstm_forward.1} parent=1 // pred_check
      _
    $region39: #{lstm_forward.1} parent=1 // pred_check_branch
      %90 = sbr.rel (0) target = $region41
    $region40: #{lstm_forward.1} parent=1 // pred_region
      %92 = vsyncadd [#allocation9], 0
      %s93 = sshll.u32 %s9, 4
      %s94 = int_to_ptr.hbm [resolvable:$true] %s93
      %s95 = sshll.u32 [#allocation10], 4
      %s96 = int_to_ptr.vmem [resolvable:$true] %s95
      %101 = dma.hbm_to_vmem [thread:$0]  %s94, 1024, %s96, [#allocation9], 128, 128, 8
    $region41: #{lstm_forward.1} parent=1 // pred_fallthru
      _
    // Predicated region
    $region42: #{lstm_forward.1} parent=1 // pred_check
      _
    $region43: #{lstm_forward.1} parent=1 // pred_check_branch
      %103 = sbr.rel (0) target = $region45
    $region44: #{lstm_forward.1} parent=1 // pred_region
      _
    $region45: #{lstm_forward.1} parent=1 // pred_fallthru
      _
    // Predicated region
    $region46: #{lstm_forward.1} parent=1 // pred_check
      _
    $region47: #{lstm_forward.1} parent=1 // pred_check_branch
      %105 = sbr.rel (0) target = $region49
    $region48: #{lstm_forward.1} parent=1 // pred_region
      _
    $region49: #{lstm_forward.1} parent=1 // pred_fallthru
      _
    // Predicated region
    $region50: #{lstm_forward.1} parent=1 // pred_check
      _
    $region51: #{lstm_forward.1} parent=1 // pred_check_branch
      %107 = sbr.rel (0) target = $region53
    $region52: #{lstm_forward.1} parent=1 // pred_region
      _
    $region53: #{lstm_forward.1} parent=1 // pred_fallthru
      _
    // Predicated region
    $region54: #{lstm_forward.1} parent=1 // pred_check
      _
    $region55: #{lstm_forward.1} parent=1 // pred_check_branch
      %109 = sbr.rel (0) target = $region57
    $region56: #{lstm_forward.1} parent=1 // pred_region
      _
    $region57: #{lstm_forward.1} parent=1 // pred_fallthru
      _
    // Predicated region
    $region58: #{lstm_forward.1} parent=1 // pred_check
      _
    $region59: #{lstm_forward.1} parent=1 // pred_check_branch
      %111 = sbr.rel (0) target = $region61
    $region60: #{lstm_forward.1} parent=1 // pred_region
      %113 = vsyncadd [#allocation12], 0
      %s115 = sshll.u32 %s14, 4
      %s116 = int_to_ptr.hbm [resolvable:$true] %s115
      %s117 = sshll.u32 [#allocation11], 4
      %s118 = int_to_ptr.vmem [resolvable:$true] %s117
      %120 = dma.hbm_to_vmem [thread:$0]  %s116, 16, %s118, [#allocation12]
    $region61: #{lstm_forward.1} parent=1 // pred_fallthru
      _
    // Predicated region
    $region62: #{lstm_forward.1} parent=1 // pred_check
      _
    $region63: #{lstm_forward.1} parent=1 // pred_check_branch
      %122 = sbr.rel (0) target = $region65
    $region64: #{lstm_forward.1} parent=1 // pred_region
      _
    $region65: #{lstm_forward.1} parent=1 // pred_fallthru
      _
    // Predicated region
    $region66: #{lstm_forward.1} parent=1 // pred_check
      _
    $region67: #{lstm_forward.1} parent=1 // pred_check_branch
      %124 = sbr.rel (0) target = $region69
    $region68: #{lstm_forward.1} parent=1 // pred_region
      _
    $region69: #{lstm_forward.1} parent=1 // pred_fallthru
      _
    // Predicated region
    $region70: #{lstm_forward.1} parent=1 // pred_check
      _
    $region71: #{lstm_forward.1} parent=1 // pred_check_branch
      %126 = sbr.rel (0) target = $region73
    $region72: #{lstm_forward.1} parent=1 // pred_region
      %128 = dma.done [#allocation3], 256
    $region73: #{lstm_forward.1} parent=1 // pred_fallthru
      _
    // Predicated region
    $region74: #{lstm_forward.1} parent=1 // pred_check
      _
    $region75: #{lstm_forward.1} parent=1 // pred_check_branch
      %130 = sbr.rel (0) target = $region77
    $region76: #{lstm_forward.1} parent=1 // pred_region
      %132 = dma.done [#allocation6], 1024
    $region77: #{lstm_forward.1} parent=1 // pred_fallthru
      _
    // Predicated region
    $region78: #{lstm_forward.1} parent=1 // pred_check
      _
    $region79: #{lstm_forward.1} parent=1 // pred_check_branch
      %134 = sbr.rel (0) target = $region81
    $region80: #{lstm_forward.1} parent=1 // pred_region
      %136 = dma.done [#allocation6], 2048
    $region81: #{lstm_forward.1} parent=1 // pred_fallthru
      _
    // Predicated region
    $region82: #{lstm_forward.1} parent=1 // pred_check
      _
    $region83: #{lstm_forward.1} parent=1 // pred_check_branch
      %138 = sbr.rel (0) target = $region85
    $region84: #{lstm_forward.1} parent=1 // pred_region
      %140 = dma.done [#allocation9], 512
    $region85: #{lstm_forward.1} parent=1 // pred_fallthru
      _
    // Predicated region
    $region86: #{lstm_forward.1} parent=1 // pred_check
      _
    $region87: #{lstm_forward.1} parent=1 // pred_check_branch
      %142 = sbr.rel (0) target = $region89
    $region88: #{lstm_forward.1} parent=1 // pred_region
      %144 = dma.done [#allocation9], 1024
    $region89: #{lstm_forward.1} parent=1 // pred_fallthru
      _
    // Predicated region
    $region90: #{lstm_forward.1} parent=1 // pred_check
      _
    $region91: #{lstm_forward.1} parent=1 // pred_check_branch
      %146 = sbr.rel (0) target = $region93
    $region92: #{lstm_forward.1} parent=1 // pred_region
      %148 = dma.done [#allocation12], 16
    $region93: #{lstm_forward.1} parent=1 // pred_fallthru
      _
    %v150 = vld [vmem:[%s0] sm:$0xff]
    %v151 = vld [vmem:[%s0 + $0x8] sm:$0xff]
    %v152 = vld [vmem:[#allocation2] sm:$0xff]
    %v153 = vld [vmem:[#allocation2 + $0x8] sm:$0xff]
    %v154 = vld [vmem:[#allocation5] sm:$0xff]
    %v155 = vld [vmem:[#allocation5 + $0x8] sm:$0xff]
    %v156 = vld [vmem:[#allocation5 + $0x10] sm:$0xff]
    %v157 = vld [vmem:[#allocation5 + $0x18] sm:$0xff]
    %v158 = vld [vmem:[#allocation5 + $0x20] sm:$0xff]
    %v159 = vld [vmem:[#allocation5 + $0x28] sm:$0xff]
    %v160 = vld [vmem:[#allocation5 + $0x30] sm:$0xff]
    %v161 = vld [vmem:[#allocation5 + $0x38] sm:$0xff]
    %vm162 = vcmask 261120
    %v164 = vsel %vm162, %v154, 0
    %v167 = vsel %vm162, %v155, 0
    %v170 = vsel %vm162, %v156, 0
    %v173 = vsel %vm162, %v157, 0
    %v176 = vsel %vm162, %v158, 0
    %v179 = vsel %vm162, %v159, 0
    %v182 = vsel %vm162, %v160, 0
    %v185 = vsel %vm162, %v161, 0
    %187 = vmatpush.msra.mxu0 0.0
    %188 = vmatpush.msra.mxu0 0.0
    %189 = vmatpush.msra.mxu0 0.0
    %190 = vmatpush.msra.mxu0 0.0
    %191 = vmatpush.msra.mxu0 0.0
    %192 = vmatpush.msra.mxu0 0.0
    %193 = vmatpush.msra.mxu0 0.0
    %194 = vmatpush.msra.mxu0 0.0
    %195 = vmatpush.msra.mxu0 0.0
    %196 = vmatpush.msra.mxu0 0.0
    %197 = vmatpush.msra.mxu0 0.0
    %198 = vmatpush.msra.mxu0 0.0
    %199 = vmatpush.msra.mxu0 %v153
    %200 = vmatpush.msra.mxu0 %v152
    %201 = vmatpush.msra.mxu0 %v151
    %202 = vmatpush.msra.mxu0 %v150
    %203 = vmatmul.f32.gmra.mxu0 %v164
    %v204 = vpop.f32.mrf.mxu0
    %v205 = vadd.f32 0.0, %v204
    %206 = vmatmul.f32.gmra.mxu0 %v167
    %v207 = vpop.f32.mrf.mxu0
    %v208 = vadd.f32 0.0, %v207
    %209 = vmatmul.f32.gmra.mxu0 %v170
    %v210 = vpop.f32.mrf.mxu0
    %v211 = vadd.f32 0.0, %v210
    %212 = vmatmul.f32.gmra.mxu0 %v173
    %v213 = vpop.f32.mrf.mxu0
    %v214 = vadd.f32 0.0, %v213
    %215 = vmatmul.f32.gmra.mxu0 %v176
    %v216 = vpop.f32.mrf.mxu0
    %v217 = vadd.f32 0.0, %v216
    %218 = vmatmul.f32.gmra.mxu0 %v179
    %v219 = vpop.f32.mrf.mxu0
    %v220 = vadd.f32 0.0, %v219
    %221 = vmatmul.f32.gmra.mxu0 %v182
    %v222 = vpop.f32.mrf.mxu0
    %v223 = vadd.f32 0.0, %v222
    %224 = vmatmul.f32.gmra.mxu0 %v185
    %v225 = vpop.f32.mrf.mxu0
    %v226 = vadd.f32 0.0, %v225
    %227 = vdwg.mxu0
    %v228 = vld [vmem:[%s3] sm:$0xff]
    %v229 = vld [vmem:[%s3 + $0x8] sm:$0xff]
    %v230 = vld [vmem:[%s3 + $0x10] sm:$0xff]
    %v231 = vld [vmem:[%s3 + $0x18] sm:$0xff]
    %v232 = vld [vmem:[%s3 + $0x20] sm:$0xff]
    %v233 = vld [vmem:[%s3 + $0x28] sm:$0xff]
    %v234 = vld [vmem:[%s3 + $0x30] sm:$0xff]
    %v235 = vld [vmem:[%s3 + $0x38] sm:$0xff]
    %v236 = vld [vmem:[%s4] sm:$0xff]
    %v237 = vld [vmem:[%s4 + $0x8] sm:$0xff]
    %v238 = vld [vmem:[%s4 + $0x10] sm:$0xff]
    %v239 = vld [vmem:[%s4 + $0x18] sm:$0xff]
    %v240 = vld [vmem:[%s5] sm:$0x3]
    %v242 = vperm.slane %v240, 0
    %v243 = vperm.slane %v240, 1
    %v247 = vsel %vm162, %v205, 0
    %v250 = vsel %vm162, %v208, 0
    %v253 = vsel %vm162, %v211, 0
    %v256 = vsel %vm162, %v214, 0
    %v259 = vsel %vm162, %v217, 0
    %v262 = vsel %vm162, %v220, 0
    %v265 = vsel %vm162, %v223, 0
    %v268 = vsel %vm162, %v226, 0
    %270 = vmatpush.msra.mxu0 0.0
    %271 = vmatpush.msra.mxu0 0.0
    %272 = vmatpush.msra.mxu0 0.0
    %273 = vmatpush.msra.mxu0 0.0
    %274 = vmatpush.msra.mxu0 0.0
    %275 = vmatpush.msra.mxu0 0.0
    %276 = vmatpush.msra.mxu0 0.0
    %277 = vmatpush.msra.mxu0 0.0
    %278 = vmatpush.msra.mxu0 0.0
    %279 = vmatpush.msra.mxu0 0.0
    %280 = vmatpush.msra.mxu0 0.0
    %281 = vmatpush.msra.mxu0 0.0
    %282 = vmatpush.msra.mxu0 %v234
    %283 = vmatpush.msra.mxu0 %v232
    %284 = vmatpush.msra.mxu0 %v230
    %285 = vmatpush.msra.mxu0 %v228
    %286 = vmatmul.f32.gmra.mxu0 %v247
    %v287 = vpop.f32.mrf.mxu0
    %v288 = vadd.f32 %v242, %v287
    %289 = vmatmul.f32.gmra.mxu0 %v250
    %v290 = vpop.f32.mrf.mxu0
    %v291 = vadd.f32 %v242, %v290
    %292 = vmatmul.f32.gmra.mxu0 %v253
    %v293 = vpop.f32.mrf.mxu0
    %v294 = vadd.f32 %v242, %v293
    %295 = vmatmul.f32.gmra.mxu0 %v256
    %v296 = vpop.f32.mrf.mxu0
    %v297 = vadd.f32 %v242, %v296
    %298 = vmatmul.f32.gmra.mxu0 %v259
    %v299 = vpop.f32.mrf.mxu0
    %v300 = vadd.f32 %v242, %v299
    %301 = vmatmul.f32.gmra.mxu0 %v262
    %v302 = vpop.f32.mrf.mxu0
    %v303 = vadd.f32 %v242, %v302
    %304 = vmatmul.f32.gmra.mxu0 %v265
    %v305 = vpop.f32.mrf.mxu0
    %v306 = vadd.f32 %v242, %v305
    %307 = vmatmul.f32.gmra.mxu0 %v268
    %v308 = vpop.f32.mrf.mxu0
    %v309 = vadd.f32 %v242, %v308
    %310 = vdwg.mxu0
    %311 = vmatpush.msra.mxu0 0.0
    %312 = vmatpush.msra.mxu0 0.0
    %313 = vmatpush.msra.mxu0 0.0
    %314 = vmatpush.msra.mxu0 0.0
    %315 = vmatpush.msra.mxu0 0.0
    %316 = vmatpush.msra.mxu0 0.0
    %317 = vmatpush.msra.mxu0 0.0
    %318 = vmatpush.msra.mxu0 0.0
    %319 = vmatpush.msra.mxu0 0.0
    %320 = vmatpush.msra.mxu0 0.0
    %321 = vmatpush.msra.mxu0 0.0
    %322 = vmatpush.msra.mxu0 0.0
    %323 = vmatpush.msra.mxu0 %v235
    %324 = vmatpush.msra.mxu0 %v233
    %325 = vmatpush.msra.mxu0 %v231
    %326 = vmatpush.msra.mxu0 %v229
    %327 = vmatmul.f32.gmra.mxu0 %v247
    %v328 = vpop.f32.mrf.mxu0
    %v329 = vadd.f32 %v243, %v328
    %330 = vmatmul.f32.gmra.mxu0 %v250
    %v331 = vpop.f32.mrf.mxu0
    %v332 = vadd.f32 %v243, %v331
    %333 = vmatmul.f32.gmra.mxu0 %v253
    %v334 = vpop.f32.mrf.mxu0
    %v335 = vadd.f32 %v243, %v334
    %336 = vmatmul.f32.gmra.mxu0 %v256
    %v337 = vpop.f32.mrf.mxu0
    %v338 = vadd.f32 %v243, %v337
    %339 = vmatmul.f32.gmra.mxu0 %v259
    %v340 = vpop.f32.mrf.mxu0
    %v341 = vadd.f32 %v243, %v340
    %342 = vmatmul.f32.gmra.mxu0 %v262
    %v343 = vpop.f32.mrf.mxu0
    %v344 = vadd.f32 %v243, %v343
    %345 = vmatmul.f32.gmra.mxu0 %v265
    %v346 = vpop.f32.mrf.mxu0
    %v347 = vadd.f32 %v243, %v346
    %348 = vmatmul.f32.gmra.mxu0 %v268
    %v349 = vpop.f32.mrf.mxu0
    %v350 = vadd.f32 %v243, %v349
    %351 = vdwg.mxu0
    %v352 = vlaneseq
    %v353 = vshrl.u32 %v352, 7
    %vm354 = vcmp.lt.s32.totalorder %v353, 4
    %v355 = vsel %vm354, %v288, %v329
    %v356 = vsel %vm354, %v291, %v332
    %v357 = vsel %vm354, %v294, %v335
    %v358 = vsel %vm354, %v297, %v338
    %v359 = vsel %vm354, %v300, %v341
    %v360 = vsel %vm354, %v303, %v344
    %v361 = vsel %vm354, %v306, %v347
    %v362 = vsel %vm354, %v309, %v350
    %v363 = vlaneseq
    %v364 = vand.u32 %v363, 127
    %vm365 = vcmp.ge.s32.totalorder %v364, 64
    %vm366 = vcmp.lt.s32.totalorder %v364, 96
    %vm367 = vmand %vm365, %vm366
    %v372 = vunpack.c.l.b16 %v236
    %v373 = vunpack.c.h.b16 %v236
    %v374 = vunpack.c.l.b16 %v237
    %v375 = vunpack.c.h.b16 %v237
    %v376 = vunpack.c.l.b16 %v238
    %v377 = vunpack.c.h.b16 %v238
    %v378 = vunpack.c.l.b16 %v239
    %v379 = vunpack.c.h.b16 %v239
    %v380 = vpack.c.b16 %v374, %v372
    %v381 = vpack.c.b16 %v375, %v373
    %v382 = vpack.c.b16 %v378, %v376
    %v383 = vpack.c.b16 %v379, %v377
    %v389 = vsel %vm162, 0, 0
    %391 = vmatpush.bf16.msra.mxu0 0
    %392 = vmatpush.bf16.msra.mxu0 0
    %393 = vmatpush.bf16.msra.mxu0 0
    %394 = vmatpush.bf16.msra.mxu0 0
    %395 = vmatpush.bf16.msra.mxu0 0
    %396 = vmatpush.bf16.msra.mxu0 0
    %397 = vmatpush.bf16.msra.mxu0 %v382
    %398 = vmatpush.bf16.msra.mxu0 %v380
    %399 = vmatmul.bf16.gmra.mxu0 %v389
    %v400 = vpop.f32.mrf.mxu0
    %v401 = vadd.f32 0.0, %v400
    %v402 = vpop.f32.mrf.mxu0
    %403 = vdwg.mxu0
    %404 = vmatpush.bf16.msra.mxu0 0
    %405 = vmatpush.bf16.msra.mxu0 0
    %406 = vmatpush.bf16.msra.mxu0 0
    %407 = vmatpush.bf16.msra.mxu0 0
    %408 = vmatpush.bf16.msra.mxu0 0
    %409 = vmatpush.bf16.msra.mxu0 0
    %410 = vmatpush.bf16.msra.mxu0 %v383
    %411 = vmatpush.bf16.msra.mxu0 %v381
    %412 = vmatmul.bf16.gmra.mxu0 %v389
    %v413 = vpop.f32.mrf.mxu0
    %v414 = vadd.f32 0.0, %v413
    %v415 = vpop.f32.mrf.mxu0
    %416 = vdwg.mxu0
    %v417 = vsel %vm354, %v401, %v414
    %v418 = vadd.f32 %v417, %v355
    %v419 = vtanh.pop %v418
    %v420 = vxor.u32 %v418, 2147483648
    %v421 = vmul.f32 %v420, 1.442695
    %v422 = vpow.pop %v421
    %v423 = vadd.f32 %v422, 1.0
    %v424 = vrcp.pop %v423
    %v425 = vmul.f32 %v423, %v424
    %v426 = vsub.f32 1.0, %v425
    %v427 = vmul.f32 %v424, %v426
    %v428 = vadd.f32 %v424, %v427
    %vm429 = vweird.f32 %v423
    %vm430 = vweird.f32 %v424
    %vm431 = vmor %vm429, %vm430
    %v432 = vsel %vm431, %v424, %v428
    %v433 = vand.u32 2147483647, %v423
    %vm434 = vcmp.eq.f32.partialorder %v433, 8.507059e+37
    %v435 = vand.u32 %v423, 2147483648
    %v436 = vor.u32 1.1754944e-38, %v435
    %v437 = vsel %vm434, %v436, %v432
    %v438 = vmul.f32 1.0, %v437
    %v439 = vsel %vm367, %v419, %v438
    %v440 = vmul.f32 %v439, 0.0
    %442 = vrot.lane.b32.xlu0 %v439, 64
    %v443 = vpop.permute.xlu0 %442
    %v445 = vmul.f32 %v439, %v443
    %447 = vrot.lane.b32.xlu0 %v445, 32
    %v448 = vpop.permute.xlu0 %447
    %v450 = vadd.f32 %v440, %v448
    %v451 = vtanh.pop %v450
    %453 = vrot.lane.b32.xlu0 %v451, 64
    %v454 = vpop.permute.xlu0 %453
    %v456 = vmul.f32 %v439, %v454
    %v457 = vpack.c.bf16 %v456, %v456
    %459 = vrot.lane.b32.xlu0 %v457, 32
    %v460 = vpop.permute.xlu0 %459
    %v462 = vsel %vm162, %v460, 0
    %464 = vmatpush.bf16.msra.mxu0 0
    %465 = vmatpush.bf16.msra.mxu0 0
    %466 = vmatpush.bf16.msra.mxu0 0
    %467 = vmatpush.bf16.msra.mxu0 0
    %468 = vmatpush.bf16.msra.mxu0 0
    %469 = vmatpush.bf16.msra.mxu0 0
    %470 = vmatpush.bf16.msra.mxu0 %v382
    %471 = vmatpush.bf16.msra.mxu0 %v380
    %472 = vmatmul.bf16.gmra.mxu0 %v462
    %v473 = vpop.f32.mrf.mxu0
    %v474 = vadd.f32 0.0, %v473
    %v475 = vpop.f32.mrf.mxu0
    %476 = vdwg.mxu0
    %477 = vmatpush.bf16.msra.mxu0 0
    %478 = vmatpush.bf16.msra.mxu0 0
    %479 = vmatpush.bf16.msra.mxu0 0
    %480 = vmatpush.bf16.msra.mxu0 0
    %481 = vmatpush.bf16.msra.mxu0 0
    %482 = vmatpush.bf16.msra.mxu0 0
    %483 = vmatpush.bf16.msra.mxu0 %v383
    %484 = vmatpush.bf16.msra.mxu0 %v381
    %485 = vmatmul.bf16.gmra.mxu0 %v462
    %v486 = vpop.f32.mrf.mxu0
    %v487 = vadd.f32 0.0, %v486
    %v488 = vpop.f32.mrf.mxu0
    %489 = vdwg.mxu0
    %v490 = vsel %vm354, %v474, %v487
    %v491 = vadd.f32 %v490, %v356
    %v492 = vtanh.pop %v491
    %v493 = vxor.u32 %v491, 2147483648
    %v494 = vmul.f32 %v493, 1.442695
    %v495 = vpow.pop %v494
    %v496 = vadd.f32 %v495, 1.0
    %v497 = vrcp.pop %v496
    %v498 = vmul.f32 %v496, %v497
    %v499 = vsub.f32 1.0, %v498
    %v500 = vmul.f32 %v497, %v499
    %v501 = vadd.f32 %v497, %v500
    %vm502 = vweird.f32 %v496
    %vm503 = vweird.f32 %v497
    %vm504 = vmor %vm502, %vm503
    %v505 = vsel %vm504, %v497, %v501
    %v506 = vand.u32 2147483647, %v496
    %vm507 = vcmp.eq.f32.partialorder %v506, 8.507059e+37
    %v508 = vand.u32 %v496, 2147483648
    %v509 = vor.u32 1.1754944e-38, %v508
    %v510 = vsel %vm507, %v509, %v505
    %v511 = vmul.f32 1.0, %v510
    %v512 = vsel %vm367, %v492, %v511
    %v513 = vmul.f32 %v512, %v450
    %515 = vrot.lane.b32.xlu0 %v512, 64
    %v516 = vpop.permute.xlu0 %515
    %v518 = vmul.f32 %v512, %v516
    %520 = vrot.lane.b32.xlu0 %v518, 32
    %v521 = vpop.permute.xlu0 %520
    %v523 = vadd.f32 %v513, %v521
    %v524 = vtanh.pop %v523
    %526 = vrot.lane.b32.xlu0 %v524, 64
    %v527 = vpop.permute.xlu0 %526
    %v529 = vmul.f32 %v512, %v527
    %v530 = vpack.c.bf16 %v529, %v529
    %532 = vrot.lane.b32.xlu0 %v530, 32
    %v533 = vpop.permute.xlu0 %532
    %v535 = vsel %vm162, %v533, 0
    %537 = vmatpush.bf16.msra.mxu0 0
    %538 = vmatpush.bf16.msra.mxu0 0
    %539 = vmatpush.bf16.msra.mxu0 0
    %540 = vmatpush.bf16.msra.mxu0 0
    %541 = vmatpush.bf16.msra.mxu0 0
    %542 = vmatpush.bf16.msra.mxu0 0
    %543 = vmatpush.bf16.msra.mxu0 %v382
    %544 = vmatpush.bf16.msra.mxu0 %v380
    %545 = vmatmul.bf16.gmra.mxu0 %v535
    %v546 = vpop.f32.mrf.mxu0
    %v547 = vadd.f32 0.0, %v546
    %v548 = vpop.f32.mrf.mxu0
    %549 = vdwg.mxu0
    %550 = vmatpush.bf16.msra.mxu0 0
    %551 = vmatpush.bf16.msra.mxu0 0
    %552 = vmatpush.bf16.msra.mxu0 0
    %553 = vmatpush.bf16.msra.mxu0 0
    %554 = vmatpush.bf16.msra.mxu0 0
    %555 = vmatpush.bf16.msra.mxu0 0
    %556 = vmatpush.bf16.msra.mxu0 %v383
    %557 = vmatpush.bf16.msra.mxu0 %v381
    %558 = vmatmul.bf16.gmra.mxu0 %v535
    %v559 = vpop.f32.mrf.mxu0
    %v560 = vadd.f32 0.0, %v559
    %v561 = vpop.f32.mrf.mxu0
    %562 = vdwg.mxu0
    %v563 = vsel %vm354, %v547, %v560
    %v564 = vadd.f32 %v563, %v357
    %v565 = vtanh.pop %v564
    %v566 = vxor.u32 %v564, 2147483648
    %v567 = vmul.f32 %v566, 1.442695
    %v568 = vpow.pop %v567
    %v569 = vadd.f32 %v568, 1.0
    %v570 = vrcp.pop %v569
    %v571 = vmul.f32 %v569, %v570
    %v572 = vsub.f32 1.0, %v571
    %v573 = vmul.f32 %v570, %v572
    %v574 = vadd.f32 %v570, %v573
    %vm575 = vweird.f32 %v569
    %vm576 = vweird.f32 %v570
    %vm577 = vmor %vm575, %vm576
    %v578 = vsel %vm577, %v570, %v574
    %v579 = vand.u32 2147483647, %v569
    %vm580 = vcmp.eq.f32.partialorder %v579, 8.507059e+37
    %v581 = vand.u32 %v569, 2147483648
    %v582 = vor.u32 1.1754944e-38, %v581
    %v583 = vsel %vm580, %v582, %v578
    %v584 = vmul.f32 1.0, %v583
    %v585 = vsel %vm367, %v565, %v584
    %v586 = vmul.f32 %v585, %v523
    %588 = vrot.lane.b32.xlu0 %v585, 64
    %v589 = vpop.permute.xlu0 %588
    %v591 = vmul.f32 %v585, %v589
    %593 = vrot.lane.b32.xlu0 %v591, 32
    %v594 = vpop.permute.xlu0 %593
    %v596 = vadd.f32 %v586, %v594
    %v597 = vtanh.pop %v596
    %599 = vrot.lane.b32.xlu0 %v597, 64
    %v600 = vpop.permute.xlu0 %599
    %v602 = vmul.f32 %v585, %v600
    %v603 = vpack.c.bf16 %v602, %v602
    %605 = vrot.lane.b32.xlu0 %v603, 32
    %v606 = vpop.permute.xlu0 %605
    %v608 = vsel %vm162, %v606, 0
    %610 = vmatpush.bf16.msra.mxu0 0
    %611 = vmatpush.bf16.msra.mxu0 0
    %612 = vmatpush.bf16.msra.mxu0 0
    %613 = vmatpush.bf16.msra.mxu0 0
    %614 = vmatpush.bf16.msra.mxu0 0
    %615 = vmatpush.bf16.msra.mxu0 0
    %616 = vmatpush.bf16.msra.mxu0 %v382
    %617 = vmatpush.bf16.msra.mxu0 %v380
    %618 = vmatmul.bf16.gmra.mxu0 %v608
    %v619 = vpop.f32.mrf.mxu0
    %v620 = vadd.f32 0.0, %v619
    %v621 = vpop.f32.mrf.mxu0
    %622 = vdwg.mxu0
    %623 = vmatpush.bf16.msra.mxu0 0
    %624 = vmatpush.bf16.msra.mxu0 0
    %625 = vmatpush.bf16.msra.mxu0 0
    %626 = vmatpush.bf16.msra.mxu0 0
    %627 = vmatpush.bf16.msra.mxu0 0
    %628 = vmatpush.bf16.msra.mxu0 0
    %629 = vmatpush.bf16.msra.mxu0 %v383
    %630 = vmatpush.bf16.msra.mxu0 %v381
    %631 = vmatmul.bf16.gmra.mxu0 %v608
    %v632 = vpop.f32.mrf.mxu0
    %v633 = vadd.f32 0.0, %v632
    %v634 = vpop.f32.mrf.mxu0
    %635 = vdwg.mxu0
    %v636 = vsel %vm354, %v620, %v633
    %v637 = vadd.f32 %v636, %v358
    %v638 = vtanh.pop %v637
    %v639 = vxor.u32 %v637, 2147483648
    %v640 = vmul.f32 %v639, 1.442695
    %v641 = vpow.pop %v640
    %v642 = vadd.f32 %v641, 1.0
    %v643 = vrcp.pop %v642
    %v644 = vmul.f32 %v642, %v643
    %v645 = vsub.f32 1.0, %v644
    %v646 = vmul.f32 %v643, %v645
    %v647 = vadd.f32 %v643, %v646
    %vm648 = vweird.f32 %v642
    %vm649 = vweird.f32 %v643
    %vm650 = vmor %vm648, %vm649
    %v651 = vsel %vm650, %v643, %v647
    %v652 = vand.u32 2147483647, %v642
    %vm653 = vcmp.eq.f32.partialorder %v652, 8.507059e+37
    %v654 = vand.u32 %v642, 2147483648
    %v655 = vor.u32 1.1754944e-38, %v654
    %v656 = vsel %vm653, %v655, %v651
    %v657 = vmul.f32 1.0, %v656
    %v658 = vsel %vm367, %v638, %v657
    %v659 = vmul.f32 %v658, %v596
    %661 = vrot.lane.b32.xlu0 %v658, 64
    %v662 = vpop.permute.xlu0 %661
    %v664 = vmul.f32 %v658, %v662
    %666 = vrot.lane.b32.xlu0 %v664, 32
    %v667 = vpop.permute.xlu0 %666
    %v669 = vadd.f32 %v659, %v667
    %v670 = vtanh.pop %v669
    %672 = vrot.lane.b32.xlu0 %v670, 64
    %v673 = vpop.permute.xlu0 %672
    %v675 = vmul.f32 %v658, %v673
    %v676 = vpack.c.bf16 %v675, %v675
    %678 = vrot.lane.b32.xlu0 %v676, 32
    %v679 = vpop.permute.xlu0 %678
    %v681 = vsel %vm162, %v679, 0
    %683 = vmatpush.bf16.msra.mxu0 0
    %684 = vmatpush.bf16.msra.mxu0 0
    %685 = vmatpush.bf16.msra.mxu0 0
    %686 = vmatpush.bf16.msra.mxu0 0
    %687 = vmatpush.bf16.msra.mxu0 0
    %688 = vmatpush.bf16.msra.mxu0 0
    %689 = vmatpush.bf16.msra.mxu0 %v382
    %690 = vmatpush.bf16.msra.mxu0 %v380
    %691 = vmatmul.bf16.gmra.mxu0 %v681
    %v692 = vpop.f32.mrf.mxu0
    %v693 = vadd.f32 0.0, %v692
    %v694 = vpop.f32.mrf.mxu0
    %695 = vdwg.mxu0
    %696 = vmatpush.bf16.msra.mxu0 0
    %697 = vmatpush.bf16.msra.mxu0 0
    %698 = vmatpush.bf16.msra.mxu0 0
    %699 = vmatpush.bf16.msra.mxu0 0
    %700 = vmatpush.bf16.msra.mxu0 0
    %701 = vmatpush.bf16.msra.mxu0 0
    %702 = vmatpush.bf16.msra.mxu0 %v383
    %703 = vmatpush.bf16.msra.mxu0 %v381
    %704 = vmatmul.bf16.gmra.mxu0 %v681
    %v705 = vpop.f32.mrf.mxu0
    %v706 = vadd.f32 0.0, %v705
    %v707 = vpop.f32.mrf.mxu0
    %708 = vdwg.mxu0
    %v709 = vsel %vm354, %v693, %v706
    %v710 = vadd.f32 %v709, %v359
    %v711 = vtanh.pop %v710
    %v712 = vxor.u32 %v710, 2147483648
    %v713 = vmul.f32 %v712, 1.442695
    %v714 = vpow.pop %v713
    %v715 = vadd.f32 %v714, 1.0
    %v716 = vrcp.pop %v715
    %v717 = vmul.f32 %v715, %v716
    %v718 = vsub.f32 1.0, %v717
    %v719 = vmul.f32 %v716, %v718
    %v720 = vadd.f32 %v716, %v719
    %vm721 = vweird.f32 %v715
    %vm722 = vweird.f32 %v716
    %vm723 = vmor %vm721, %vm722
    %v724 = vsel %vm723, %v716, %v720
    %v725 = vand.u32 2147483647, %v715
    %vm726 = vcmp.eq.f32.partialorder %v725, 8.507059e+37
    %v727 = vand.u32 %v715, 2147483648
    %v728 = vor.u32 1.1754944e-38, %v727
    %v729 = vsel %vm726, %v728, %v724
    %v730 = vmul.f32 1.0, %v729
    %v731 = vsel %vm367, %v711, %v730
    %v732 = vmul.f32 %v731, %v669
    %734 = vrot.lane.b32.xlu0 %v731, 64
    %v735 = vpop.permute.xlu0 %734
    %v737 = vmul.f32 %v731, %v735
    %739 = vrot.lane.b32.xlu0 %v737, 32
    %v740 = vpop.permute.xlu0 %739
    %v742 = vadd.f32 %v732, %v740
    %v743 = vtanh.pop %v742
    %745 = vrot.lane.b32.xlu0 %v743, 64
    %v746 = vpop.permute.xlu0 %745
    %v748 = vmul.f32 %v731, %v746
    %v749 = vpack.c.bf16 %v748, %v748
    %751 = vrot.lane.b32.xlu0 %v749, 32
    %v752 = vpop.permute.xlu0 %751
    %v754 = vsel %vm162, %v752, 0
    %756 = vmatpush.bf16.msra.mxu0 0
    %757 = vmatpush.bf16.msra.mxu0 0
    %758 = vmatpush.bf16.msra.mxu0 0
    %759 = vmatpush.bf16.msra.mxu0 0
    %760 = vmatpush.bf16.msra.mxu0 0
    %761 = vmatpush.bf16.msra.mxu0 0
    %762 = vmatpush.bf16.msra.mxu0 %v382
    %763 = vmatpush.bf16.msra.mxu0 %v380
    %764 = vmatmul.bf16.gmra.mxu0 %v754
    %v765 = vpop.f32.mrf.mxu0
    %v766 = vadd.f32 0.0, %v765
    %v767 = vpop.f32.mrf.mxu0
    %768 = vdwg.mxu0
    %769 = vmatpush.bf16.msra.mxu0 0
    %770 = vmatpush.bf16.msra.mxu0 0
    %771 = vmatpush.bf16.msra.mxu0 0
    %772 = vmatpush.bf16.msra.mxu0 0
    %773 = vmatpush.bf16.msra.mxu0 0
    %774 = vmatpush.bf16.msra.mxu0 0
    %775 = vmatpush.bf16.msra.mxu0 %v383
    %776 = vmatpush.bf16.msra.mxu0 %v381
    %777 = vmatmul.bf16.gmra.mxu0 %v754
    %v778 = vpop.f32.mrf.mxu0
    %v779 = vadd.f32 0.0, %v778
    %v780 = vpop.f32.mrf.mxu0
    %781 = vdwg.mxu0
    %v782 = vsel %vm354, %v766, %v779
    %v783 = vadd.f32 %v782, %v360
    %v784 = vtanh.pop %v783
    %v785 = vxor.u32 %v783, 2147483648
    %v786 = vmul.f32 %v785, 1.442695
    %v787 = vpow.pop %v786
    %v788 = vadd.f32 %v787, 1.0
    %v789 = vrcp.pop %v788
    %v790 = vmul.f32 %v788, %v789
    %v791 = vsub.f32 1.0, %v790
    %v792 = vmul.f32 %v789, %v791
    %v793 = vadd.f32 %v789, %v792
    %vm794 = vweird.f32 %v788
    %vm795 = vweird.f32 %v789
    %vm796 = vmor %vm794, %vm795
    %v797 = vsel %vm796, %v789, %v793
    %v798 = vand.u32 2147483647, %v788
    %vm799 = vcmp.eq.f32.partialorder %v798, 8.507059e+37
    %v800 = vand.u32 %v788, 2147483648
    %v801 = vor.u32 1.1754944e-38, %v800
    %v802 = vsel %vm799, %v801, %v797
    %v803 = vmul.f32 1.0, %v802
    %v804 = vsel %vm367, %v784, %v803
    %v805 = vmul.f32 %v804, %v742
    %807 = vrot.lane.b32.xlu0 %v804, 64
    %v808 = vpop.permute.xlu0 %807
    %v810 = vmul.f32 %v804, %v808
    %812 = vrot.lane.b32.xlu0 %v810, 32
    %v813 = vpop.permute.xlu0 %812
    %v815 = vadd.f32 %v805, %v813
    %v816 = vtanh.pop %v815
    %818 = vrot.lane.b32.xlu0 %v816, 64
    %v819 = vpop.permute.xlu0 %818
    %v821 = vmul.f32 %v804, %v819
    %v822 = vpack.c.bf16 %v821, %v821
    %824 = vrot.lane.b32.xlu0 %v822, 32
    %v825 = vpop.permute.xlu0 %824
    %v827 = vsel %vm162, %v825, 0
    %829 = vmatpush.bf16.msra.mxu0 0
    %830 = vmatpush.bf16.msra.mxu0 0
    %831 = vmatpush.bf16.msra.mxu0 0
    %832 = vmatpush.bf16.msra.mxu0 0
    %833 = vmatpush.bf16.msra.mxu0 0
    %834 = vmatpush.bf16.msra.mxu0 0
    %835 = vmatpush.bf16.msra.mxu0 %v382
    %836 = vmatpush.bf16.msra.mxu0 %v380
    %837 = vmatmul.bf16.gmra.mxu0 %v827
    %v838 = vpop.f32.mrf.mxu0
    %v839 = vadd.f32 0.0, %v838
    %v840 = vpop.f32.mrf.mxu0
    %841 = vdwg.mxu0
    %842 = vmatpush.bf16.msra.mxu0 0
    %843 = vmatpush.bf16.msra.mxu0 0
    %844 = vmatpush.bf16.msra.mxu0 0
    %845 = vmatpush.bf16.msra.mxu0 0
    %846 = vmatpush.bf16.msra.mxu0 0
    %847 = vmatpush.bf16.msra.mxu0 0
    %848 = vmatpush.bf16.msra.mxu0 %v383
    %849 = vmatpush.bf16.msra.mxu0 %v381
    %850 = vmatmul.bf16.gmra.mxu0 %v827
    %v851 = vpop.f32.mrf.mxu0
    %v852 = vadd.f32 0.0, %v851
    %v853 = vpop.f32.mrf.mxu0
    %854 = vdwg.mxu0
    %v855 = vsel %vm354, %v839, %v852
    %v856 = vadd.f32 %v855, %v361
    %v857 = vtanh.pop %v856
    %v858 = vxor.u32 %v856, 2147483648
    %v859 = vmul.f32 %v858, 1.442695
    %v860 = vpow.pop %v859
    %v861 = vadd.f32 %v860, 1.0
    %v862 = vrcp.pop %v861
    %v863 = vmul.f32 %v861, %v862
    %v864 = vsub.f32 1.0, %v863
    %v865 = vmul.f32 %v862, %v864
    %v866 = vadd.f32 %v862, %v865
    %vm867 = vweird.f32 %v861
    %vm868 = vweird.f32 %v862
    %vm869 = vmor %vm867, %vm868
    %v870 = vsel %vm869, %v862, %v866
    %v871 = vand.u32 2147483647, %v861
    %vm872 = vcmp.eq.f32.partialorder %v871, 8.507059e+37
    %v873 = vand.u32 %v861, 2147483648
    %v874 = vor.u32 1.1754944e-38, %v873
    %v875 = vsel %vm872, %v874, %v870
    %v876 = vmul.f32 1.0, %v875
    %v877 = vsel %vm367, %v857, %v876
    %v878 = vmul.f32 %v877, %v815
    %880 = vrot.lane.b32.xlu0 %v877, 64
    %v881 = vpop.permute.xlu0 %880
    %v883 = vmul.f32 %v877, %v881
    %885 = vrot.lane.b32.xlu0 %v883, 32
    %v886 = vpop.permute.xlu0 %885
    %v888 = vadd.f32 %v878, %v886
    %v889 = vtanh.pop %v888
    %891 = vrot.lane.b32.xlu0 %v889, 64
    %v892 = vpop.permute.xlu0 %891
    %v894 = vmul.f32 %v877, %v892
    %v895 = vpack.c.bf16 %v894, %v894
    %897 = vrot.lane.b32.xlu0 %v895, 32
    %v898 = vpop.permute.xlu0 %897
    %v900 = vsel %vm162, %v898, 0
    %902 = vmatpush.bf16.msra.mxu0 0
    %903 = vmatpush.bf16.msra.mxu0 0
    %904 = vmatpush.bf16.msra.mxu0 0
    %905 = vmatpush.bf16.msra.mxu0 0
    %906 = vmatpush.bf16.msra.mxu0 0
    %907 = vmatpush.bf16.msra.mxu0 0
    %908 = vmatpush.bf16.msra.mxu0 %v382
    %909 = vmatpush.bf16.msra.mxu0 %v380
    %910 = vmatmul.bf16.gmra.mxu0 %v900
    %v911 = vpop.f32.mrf.mxu0
    %v912 = vadd.f32 0.0, %v911
    %v913 = vpop.f32.mrf.mxu0
    %914 = vdwg.mxu0
    %915 = vmatpush.bf16.msra.mxu0 0
    %916 = vmatpush.bf16.msra.mxu0 0
    %917 = vmatpush.bf16.msra.mxu0 0
    %918 = vmatpush.bf16.msra.mxu0 0
    %919 = vmatpush.bf16.msra.mxu0 0
    %920 = vmatpush.bf16.msra.mxu0 0
    %921 = vmatpush.bf16.msra.mxu0 %v383
    %922 = vmatpush.bf16.msra.mxu0 %v381
    %923 = vmatmul.bf16.gmra.mxu0 %v900
    %v924 = vpop.f32.mrf.mxu0
    %v925 = vadd.f32 0.0, %v924
    %v926 = vpop.f32.mrf.mxu0
    %927 = vdwg.mxu0
    %v928 = vsel %vm354, %v912, %v925
    %v929 = vadd.f32 %v928, %v362
    %v930 = vtanh.pop %v929
    %v931 = vxor.u32 %v929, 2147483648
    %v932 = vmul.f32 %v931, 1.442695
    %v933 = vpow.pop %v932
    %v934 = vadd.f32 %v933, 1.0
    %v935 = vrcp.pop %v934
    %v936 = vmul.f32 %v934, %v935
    %v937 = vsub.f32 1.0, %v936
    %v938 = vmul.f32 %v935, %v937
    %v939 = vadd.f32 %v935, %v938
    %vm940 = vweird.f32 %v934
    %vm941 = vweird.f32 %v935
    %vm942 = vmor %vm940, %vm941
    %v943 = vsel %vm942, %v935, %v939
    %v944 = vand.u32 2147483647, %v934
    %vm945 = vcmp.eq.f32.partialorder %v944, 8.507059e+37
    %v946 = vand.u32 %v934, 2147483648
    %v947 = vor.u32 1.1754944e-38, %v946
    %v948 = vsel %vm945, %v947, %v943
    %v949 = vmul.f32 1.0, %v948
    %v950 = vsel %vm367, %v930, %v949
    %v951 = vmul.f32 %v950, %v888
    %953 = vrot.lane.b32.xlu0 %v950, 64
    %v954 = vpop.permute.xlu0 %953
    %v956 = vmul.f32 %v950, %v954
    %958 = vrot.lane.b32.xlu0 %v956, 32
    %v959 = vpop.permute.xlu0 %958
    %v961 = vadd.f32 %v951, %v959
    %v962 = vtanh.pop %v961
    %964 = vrot.lane.b32.xlu0 %v962, 64
    %v965 = vpop.permute.xlu0 %964
    %v967 = vmul.f32 %v950, %v965
    %969 = vrot.lane.b32.xlu0 %v456, 32
    %v970 = vpop.permute.xlu0 %969
    %v973 = vrot.slane %v967, 4
    %974 = vrot.lane.b32.xlu0 %v973, 64
    %v975 = vpop.permute.xlu0 %974
    %v977 = vsel %vm162, %v970, %v975
    %979 = vrot.lane.b32.xlu0 %v529, 32
    %v980 = vpop.permute.xlu0 %979
    %v983 = vrot.slane %v894, 4
    %984 = vrot.lane.b32.xlu0 %v983, 64
    %v985 = vpop.permute.xlu0 %984
    %v987 = vsel %vm162, %v980, %v985
    %989 = vrot.lane.b32.xlu0 %v602, 32
    %v990 = vpop.permute.xlu0 %989
    %v993 = vrot.slane %v821, 4
    %994 = vrot.lane.b32.xlu0 %v993, 64
    %v995 = vpop.permute.xlu0 %994
    %v997 = vsel %vm162, %v990, %v995
    %999 = vrot.lane.b32.xlu0 %v675, 32
    %v1000 = vpop.permute.xlu0 %999
    %v1003 = vrot.slane %v748, 4
    %1004 = vrot.lane.b32.xlu0 %v1003, 64
    %v1005 = vpop.permute.xlu0 %1004
    %v1007 = vsel %vm162, %v1000, %v1005
    %1008 = vrot.lane.b32.xlu0 %v748, 32
    %v1009 = vpop.permute.xlu0 %1008
    %v1011 = vrot.slane %v675, 4
    %1012 = vrot.lane.b32.xlu0 %v1011, 64
    %v1013 = vpop.permute.xlu0 %1012
    %v1015 = vsel %vm162, %v1009, %v1013
    %1016 = vrot.lane.b32.xlu0 %v821, 32
    %v1017 = vpop.permute.xlu0 %1016
    %v1019 = vrot.slane %v602, 4
    %1020 = vrot.lane.b32.xlu0 %v1019, 64
    %v1021 = vpop.permute.xlu0 %1020
    %v1023 = vsel %vm162, %v1017, %v1021
    %1024 = vrot.lane.b32.xlu0 %v894, 32
    %v1025 = vpop.permute.xlu0 %1024
    %v1027 = vrot.slane %v529, 4
    %1028 = vrot.lane.b32.xlu0 %v1027, 64
    %v1029 = vpop.permute.xlu0 %1028
    %v1031 = vsel %vm162, %v1025, %v1029
    %1032 = vrot.lane.b32.xlu0 %v967, 32
    %v1033 = vpop.permute.xlu0 %1032
    %v1035 = vrot.slane %v456, 4
    %1036 = vrot.lane.b32.xlu0 %v1035, 64
    %v1037 = vpop.permute.xlu0 %1036
    %v1039 = vsel %vm162, %v1033, %v1037
    %v1041 = vrot.slane %v1039, 4
    %v1044 = vrot.slane %v1031, 4
    %v1047 = vrot.slane %v1023, 4
    %v1050 = vrot.slane %v1015, 4
    %v1053 = vrot.slane %v1007, 4
    %v1056 = vrot.slane %v997, 4
    %v1059 = vrot.slane %v987, 4
    %v1062 = vrot.slane %v977, 4
    %vm1064 = vcmask 1043456
    %v1065 = vsel %vm1064, %v977, %v1041
    %v1066 = vsel %vm1064, %v987, %v1044
    %v1067 = vsel %vm1064, %v997, %v1047
    %v1068 = vsel %vm1064, %v1007, %v1050
    %v1069 = vsel %vm1064, %v1015, %v1053
    %v1070 = vsel %vm1064, %v1023, %v1056
    %v1071 = vsel %vm1064, %v1031, %v1059
    %v1072 = vsel %vm1064, %v1039, %v1062
    %v1073 = vld [vmem:[#allocation7] sm:$0xff]
    %v1074 = vld [vmem:[#allocation7 + $0x8] sm:$0xff]
    %v1075 = vld [vmem:[#allocation7 + $0x10] sm:$0xff]
    %v1076 = vld [vmem:[#allocation7 + $0x18] sm:$0xff]
    %v1077 = vld [vmem:[#allocation7 + $0x20] sm:$0xff]
    %v1078 = vld [vmem:[#allocation7 + $0x28] sm:$0xff]
    %v1079 = vld [vmem:[#allocation7 + $0x30] sm:$0xff]
    %v1080 = vld [vmem:[#allocation7 + $0x38] sm:$0xff]
    %v1081 = vld [vmem:[#allocation7 + $0x40] sm:$0xff]
    %v1082 = vld [vmem:[#allocation7 + $0x48] sm:$0xff]
    %v1083 = vld [vmem:[#allocation7 + $0x50] sm:$0xff]
    %v1084 = vld [vmem:[#allocation7 + $0x58] sm:$0xff]
    %v1085 = vld [vmem:[#allocation7 + $0x60] sm:$0xff]
    %v1086 = vld [vmem:[#allocation7 + $0x68] sm:$0xff]
    %v1087 = vld [vmem:[#allocation7 + $0x70] sm:$0xff]
    %v1088 = vld [vmem:[#allocation7 + $0x78] sm:$0xff]
    %v1089 = vld [vmem:[#allocation8] sm:$0xff]
    %v1090 = vld [vmem:[#allocation8 + $0x8] sm:$0xff]
    %v1091 = vld [vmem:[#allocation8 + $0x10] sm:$0xff]
    %v1092 = vld [vmem:[#allocation8 + $0x18] sm:$0xff]
    %v1093 = vld [vmem:[%s8] sm:$0x3]
    %v1095 = vperm.slane %v1093, 0
    %v1096 = vperm.slane %v1093, 1
    %vm1099 = vcmask 523264
    %v1101 = vsel %vm1099, %v1065, 0
    %v1104 = vsel %vm1099, %v1066, 0
    %v1107 = vsel %vm1099, %v1067, 0
    %v1110 = vsel %vm1099, %v1068, 0
    %v1113 = vsel %vm1099, %v1069, 0
    %v1116 = vsel %vm1099, %v1070, 0
    %v1119 = vsel %vm1099, %v1071, 0
    %v1122 = vsel %vm1099, %v1072, 0
    %1124 = vmatpush.msra.mxu0 0.0
    %1125 = vmatpush.msra.mxu0 0.0
    %1126 = vmatpush.msra.mxu0 0.0
    %1127 = vmatpush.msra.mxu0 0.0
    %1128 = vmatpush.msra.mxu0 0.0
    %1129 = vmatpush.msra.mxu0 0.0
    %1130 = vmatpush.msra.mxu0 0.0
    %1131 = vmatpush.msra.mxu0 0.0
    %1132 = vmatpush.msra.mxu0 %v1087
    %1133 = vmatpush.msra.mxu0 %v1085
    %1134 = vmatpush.msra.mxu0 %v1083
    %1135 = vmatpush.msra.mxu0 %v1081
    %1136 = vmatpush.msra.mxu0 %v1079
    %1137 = vmatpush.msra.mxu0 %v1077
    %1138 = vmatpush.msra.mxu0 %v1075
    %1139 = vmatpush.msra.mxu0 %v1073
    %1140 = vmatmul.f32.gmra.mxu0 %v1101
    %v1141 = vpop.f32.mrf.mxu0
    %v1142 = vadd.f32 %v1095, %v1141
    %1143 = vmatmul.f32.gmra.mxu0 %v1104
    %v1144 = vpop.f32.mrf.mxu0
    %v1145 = vadd.f32 %v1095, %v1144
    %1146 = vmatmul.f32.gmra.mxu0 %v1107
    %v1147 = vpop.f32.mrf.mxu0
    %v1148 = vadd.f32 %v1095, %v1147
    %1149 = vmatmul.f32.gmra.mxu0 %v1110
    %v1150 = vpop.f32.mrf.mxu0
    %v1151 = vadd.f32 %v1095, %v1150
    %1152 = vmatmul.f32.gmra.mxu0 %v1113
    %v1153 = vpop.f32.mrf.mxu0
    %v1154 = vadd.f32 %v1095, %v1153
    %1155 = vmatmul.f32.gmra.mxu0 %v1116
    %v1156 = vpop.f32.mrf.mxu0
    %v1157 = vadd.f32 %v1095, %v1156
    %1158 = vmatmul.f32.gmra.mxu0 %v1119
    %v1159 = vpop.f32.mrf.mxu0
    %v1160 = vadd.f32 %v1095, %v1159
    %1161 = vmatmul.f32.gmra.mxu0 %v1122
    %v1162 = vpop.f32.mrf.mxu0
    %v1163 = vadd.f32 %v1095, %v1162
    %1164 = vdwg.mxu0
    %1165 = vmatpush.msra.mxu0 0.0
    %1166 = vmatpush.msra.mxu0 0.0
    %1167 = vmatpush.msra.mxu0 0.0
    %1168 = vmatpush.msra.mxu0 0.0
    %1169 = vmatpush.msra.mxu0 0.0
    %1170 = vmatpush.msra.mxu0 0.0
    %1171 = vmatpush.msra.mxu0 0.0
    %1172 = vmatpush.msra.mxu0 0.0
    %1173 = vmatpush.msra.mxu0 %v1088
    %1174 = vmatpush.msra.mxu0 %v1086
    %1175 = vmatpush.msra.mxu0 %v1084
    %1176 = vmatpush.msra.mxu0 %v1082
    %1177 = vmatpush.msra.mxu0 %v1080
    %1178 = vmatpush.msra.mxu0 %v1078
    %1179 = vmatpush.msra.mxu0 %v1076
    %1180 = vmatpush.msra.mxu0 %v1074
    %1181 = vmatmul.f32.gmra.mxu0 %v1101
    %v1182 = vpop.f32.mrf.mxu0
    %v1183 = vadd.f32 %v1096, %v1182
    %1184 = vmatmul.f32.gmra.mxu0 %v1104
    %v1185 = vpop.f32.mrf.mxu0
    %v1186 = vadd.f32 %v1096, %v1185
    %1187 = vmatmul.f32.gmra.mxu0 %v1107
    %v1188 = vpop.f32.mrf.mxu0
    %v1189 = vadd.f32 %v1096, %v1188
    %1190 = vmatmul.f32.gmra.mxu0 %v1110
    %v1191 = vpop.f32.mrf.mxu0
    %v1192 = vadd.f32 %v1096, %v1191
    %1193 = vmatmul.f32.gmra.mxu0 %v1113
    %v1194 = vpop.f32.mrf.mxu0
    %v1195 = vadd.f32 %v1096, %v1194
    %1196 = vmatmul.f32.gmra.mxu0 %v1116
    %v1197 = vpop.f32.mrf.mxu0
    %v1198 = vadd.f32 %v1096, %v1197
    %1199 = vmatmul.f32.gmra.mxu0 %v1119
    %v1200 = vpop.f32.mrf.mxu0
    %v1201 = vadd.f32 %v1096, %v1200
    %1202 = vmatmul.f32.gmra.mxu0 %v1122
    %v1203 = vpop.f32.mrf.mxu0
    %v1204 = vadd.f32 %v1096, %v1203
    %1205 = vdwg.mxu0
    %v1206 = vsel %vm354, %v1142, %v1183
    %v1207 = vsel %vm354, %v1145, %v1186
    %v1208 = vsel %vm354, %v1148, %v1189
    %v1209 = vsel %vm354, %v1151, %v1192
    %v1210 = vsel %vm354, %v1154, %v1195
    %v1211 = vsel %vm354, %v1157, %v1198
    %v1212 = vsel %vm354, %v1160, %v1201
    %v1213 = vsel %vm354, %v1163, %v1204
    %v1218 = vunpack.c.l.b16 %v1089
    %v1219 = vunpack.c.h.b16 %v1089
    %v1220 = vunpack.c.l.b16 %v1090
    %v1221 = vunpack.c.h.b16 %v1090
    %v1222 = vunpack.c.l.b16 %v1091
    %v1223 = vunpack.c.h.b16 %v1091
    %v1224 = vunpack.c.l.b16 %v1092
    %v1225 = vunpack.c.h.b16 %v1092
    %v1226 = vpack.c.b16 %v1220, %v1218
    %v1227 = vpack.c.b16 %v1221, %v1219
    %v1228 = vpack.c.b16 %v1224, %v1222
    %v1229 = vpack.c.b16 %v1225, %v1223
    %1234 = vmatpush.bf16.msra.mxu0 0
    %1235 = vmatpush.bf16.msra.mxu0 0
    %1236 = vmatpush.bf16.msra.mxu0 0
    %1237 = vmatpush.bf16.msra.mxu0 0
    %1238 = vmatpush.bf16.msra.mxu0 0
    %1239 = vmatpush.bf16.msra.mxu0 0
    %1240 = vmatpush.bf16.msra.mxu0 %v1228
    %1241 = vmatpush.bf16.msra.mxu0 %v1226
    %1242 = vmatmul.bf16.gmra.mxu0 %v389
    %v1243 = vpop.f32.mrf.mxu0
    %v1244 = vadd.f32 0.0, %v1243
    %v1245 = vpop.f32.mrf.mxu0
    %1246 = vdwg.mxu0
    %1247 = vmatpush.bf16.msra.mxu0 0
    %1248 = vmatpush.bf16.msra.mxu0 0
    %1249 = vmatpush.bf16.msra.mxu0 0
    %1250 = vmatpush.bf16.msra.mxu0 0
    %1251 = vmatpush.bf16.msra.mxu0 0
    %1252 = vmatpush.bf16.msra.mxu0 0
    %1253 = vmatpush.bf16.msra.mxu0 %v1229
    %1254 = vmatpush.bf16.msra.mxu0 %v1227
    %1255 = vmatmul.bf16.gmra.mxu0 %v389
    %v1256 = vpop.f32.mrf.mxu0
    %v1257 = vadd.f32 0.0, %v1256
    %v1258 = vpop.f32.mrf.mxu0
    %1259 = vdwg.mxu0
    %v1260 = vsel %vm354, %v1244, %v1257
    %v1261 = vadd.f32 %v1260, %v1206
    %v1262 = vtanh.pop %v1261
    %v1263 = vxor.u32 %v1261, 2147483648
    %v1264 = vmul.f32 %v1263, 1.442695
    %v1265 = vpow.pop %v1264
    %v1266 = vadd.f32 %v1265, 1.0
    %v1267 = vrcp.pop %v1266
    %v1268 = vmul.f32 %v1266, %v1267
    %v1269 = vsub.f32 1.0, %v1268
    %v1270 = vmul.f32 %v1267, %v1269
    %v1271 = vadd.f32 %v1267, %v1270
    %vm1272 = vweird.f32 %v1266
    %vm1273 = vweird.f32 %v1267
    %vm1274 = vmor %vm1272, %vm1273
    %v1275 = vsel %vm1274, %v1267, %v1271
    %v1276 = vand.u32 2147483647, %v1266
    %vm1277 = vcmp.eq.f32.partialorder %v1276, 8.507059e+37
    %v1278 = vand.u32 %v1266, 2147483648
    %v1279 = vor.u32 1.1754944e-38, %v1278
    %v1280 = vsel %vm1277, %v1279, %v1275
    %v1281 = vmul.f32 1.0, %v1280
    %v1282 = vsel %vm367, %v1262, %v1281
    %v1283 = vmul.f32 %v1282, 0.0
    %1285 = vrot.lane.b32.xlu0 %v1282, 64
    %v1286 = vpop.permute.xlu0 %1285
    %v1288 = vmul.f32 %v1282, %v1286
    %1290 = vrot.lane.b32.xlu0 %v1288, 32
    %v1291 = vpop.permute.xlu0 %1290
    %v1293 = vadd.f32 %v1283, %v1291
    %v1294 = vtanh.pop %v1293
    %1296 = vrot.lane.b32.xlu0 %v1294, 64
    %v1297 = vpop.permute.xlu0 %1296
    %v1299 = vmul.f32 %v1282, %v1297
    %v1300 = vpack.c.bf16 %v1299, %v1299
    %1302 = vrot.lane.b32.xlu0 %v1300, 32
    %v1303 = vpop.permute.xlu0 %1302
    %v1305 = vsel %vm162, %v1303, 0
    %1307 = vmatpush.bf16.msra.mxu0 0
    %1308 = vmatpush.bf16.msra.mxu0 0
    %1309 = vmatpush.bf16.msra.mxu0 0
    %1310 = vmatpush.bf16.msra.mxu0 0
    %1311 = vmatpush.bf16.msra.mxu0 0
    %1312 = vmatpush.bf16.msra.mxu0 0
    %1313 = vmatpush.bf16.msra.mxu0 %v1228
    %1314 = vmatpush.bf16.msra.mxu0 %v1226
    %1315 = vmatmul.bf16.gmra.mxu0 %v1305
    %v1316 = vpop.f32.mrf.mxu0
    %v1317 = vadd.f32 0.0, %v1316
    %v1318 = vpop.f32.mrf.mxu0
    %1319 = vdwg.mxu0
    %1320 = vmatpush.bf16.msra.mxu0 0
    %1321 = vmatpush.bf16.msra.mxu0 0
    %1322 = vmatpush.bf16.msra.mxu0 0
    %1323 = vmatpush.bf16.msra.mxu0 0
    %1324 = vmatpush.bf16.msra.mxu0 0
    %1325 = vmatpush.bf16.msra.mxu0 0
    %1326 = vmatpush.bf16.msra.mxu0 %v1229
    %1327 = vmatpush.bf16.msra.mxu0 %v1227
    %1328 = vmatmul.bf16.gmra.mxu0 %v1305
    %v1329 = vpop.f32.mrf.mxu0
    %v1330 = vadd.f32 0.0, %v1329
    %v1331 = vpop.f32.mrf.mxu0
    %1332 = vdwg.mxu0
    %v1333 = vsel %vm354, %v1317, %v1330
    %v1334 = vadd.f32 %v1333, %v1207
    %v1335 = vtanh.pop %v1334
    %v1336 = vxor.u32 %v1334, 2147483648
    %v1337 = vmul.f32 %v1336, 1.442695
    %v1338 = vpow.pop %v1337
    %v1339 = vadd.f32 %v1338, 1.0
    %v1340 = vrcp.pop %v1339
    %v1341 = vmul.f32 %v1339, %v1340
    %v1342 = vsub.f32 1.0, %v1341
    %v1343 = vmul.f32 %v1340, %v1342
    %v1344 = vadd.f32 %v1340, %v1343
    %vm1345 = vweird.f32 %v1339
    %vm1346 = vweird.f32 %v1340
    %vm1347 = vmor %vm1345, %vm1346
    %v1348 = vsel %vm1347, %v1340, %v1344
    %v1349 = vand.u32 2147483647, %v1339
    %vm1350 = vcmp.eq.f32.partialorder %v1349, 8.507059e+37
    %v1351 = vand.u32 %v1339, 2147483648
    %v1352 = vor.u32 1.1754944e-38, %v1351
    %v1353 = vsel %vm1350, %v1352, %v1348
    %v1354 = vmul.f32 1.0, %v1353
    %v1355 = vsel %vm367, %v1335, %v1354
    %v1356 = vmul.f32 %v1355, %v1293
    %1358 = vrot.lane.b32.xlu0 %v1355, 64
    %v1359 = vpop.permute.xlu0 %1358
    %v1361 = vmul.f32 %v1355, %v1359
    %1363 = vrot.lane.b32.xlu0 %v1361, 32
    %v1364 = vpop.permute.xlu0 %1363
    %v1366 = vadd.f32 %v1356, %v1364
    %v1367 = vtanh.pop %v1366
    %1369 = vrot.lane.b32.xlu0 %v1367, 64
    %v1370 = vpop.permute.xlu0 %1369
    %v1372 = vmul.f32 %v1355, %v1370
    %v1373 = vpack.c.bf16 %v1372, %v1372
    %1375 = vrot.lane.b32.xlu0 %v1373, 32
    %v1376 = vpop.permute.xlu0 %1375
    %v1378 = vsel %vm162, %v1376, 0
    %1380 = vmatpush.bf16.msra.mxu0 0
    %1381 = vmatpush.bf16.msra.mxu0 0
    %1382 = vmatpush.bf16.msra.mxu0 0
    %1383 = vmatpush.bf16.msra.mxu0 0
    %1384 = vmatpush.bf16.msra.mxu0 0
    %1385 = vmatpush.bf16.msra.mxu0 0
    %1386 = vmatpush.bf16.msra.mxu0 %v1228
    %1387 = vmatpush.bf16.msra.mxu0 %v1226
    %1388 = vmatmul.bf16.gmra.mxu0 %v1378
    %v1389 = vpop.f32.mrf.mxu0
    %v1390 = vadd.f32 0.0, %v1389
    %v1391 = vpop.f32.mrf.mxu0
    %1392 = vdwg.mxu0
    %1393 = vmatpush.bf16.msra.mxu0 0
    %1394 = vmatpush.bf16.msra.mxu0 0
    %1395 = vmatpush.bf16.msra.mxu0 0
    %1396 = vmatpush.bf16.msra.mxu0 0
    %1397 = vmatpush.bf16.msra.mxu0 0
    %1398 = vmatpush.bf16.msra.mxu0 0
    %1399 = vmatpush.bf16.msra.mxu0 %v1229
    %1400 = vmatpush.bf16.msra.mxu0 %v1227
    %1401 = vmatmul.bf16.gmra.mxu0 %v1378
    %v1402 = vpop.f32.mrf.mxu0
    %v1403 = vadd.f32 0.0, %v1402
    %v1404 = vpop.f32.mrf.mxu0
    %1405 = vdwg.mxu0
    %v1406 = vsel %vm354, %v1390, %v1403
    %v1407 = vadd.f32 %v1406, %v1208
    %v1408 = vtanh.pop %v1407
    %v1409 = vxor.u32 %v1407, 2147483648
    %v1410 = vmul.f32 %v1409, 1.442695
    %v1411 = vpow.pop %v1410
    %v1412 = vadd.f32 %v1411, 1.0
    %v1413 = vrcp.pop %v1412
    %v1414 = vmul.f32 %v1412, %v1413
    %v1415 = vsub.f32 1.0, %v1414
    %v1416 = vmul.f32 %v1413, %v1415
    %v1417 = vadd.f32 %v1413, %v1416
    %vm1418 = vweird.f32 %v1412
    %vm1419 = vweird.f32 %v1413
    %vm1420 = vmor %vm1418, %vm1419
    %v1421 = vsel %vm1420, %v1413, %v1417
    %v1422 = vand.u32 2147483647, %v1412
    %vm1423 = vcmp.eq.f32.partialorder %v1422, 8.507059e+37
    %v1424 = vand.u32 %v1412, 2147483648
    %v1425 = vor.u32 1.1754944e-38, %v1424
    %v1426 = vsel %vm1423, %v1425, %v1421
    %v1427 = vmul.f32 1.0, %v1426
    %v1428 = vsel %vm367, %v1408, %v1427
    %v1429 = vmul.f32 %v1428, %v1366
    %1431 = vrot.lane.b32.xlu0 %v1428, 64
    %v1432 = vpop.permute.xlu0 %1431
    %v1434 = vmul.f32 %v1428, %v1432
    %1436 = vrot.lane.b32.xlu0 %v1434, 32
    %v1437 = vpop.permute.xlu0 %1436
    %v1439 = vadd.f32 %v1429, %v1437
    %v1440 = vtanh.pop %v1439
    %1442 = vrot.lane.b32.xlu0 %v1440, 64
    %v1443 = vpop.permute.xlu0 %1442
    %v1445 = vmul.f32 %v1428, %v1443
    %v1446 = vpack.c.bf16 %v1445, %v1445
    %1448 = vrot.lane.b32.xlu0 %v1446, 32
    %v1449 = vpop.permute.xlu0 %1448
    %v1451 = vsel %vm162, %v1449, 0
    %1453 = vmatpush.bf16.msra.mxu0 0
    %1454 = vmatpush.bf16.msra.mxu0 0
    %1455 = vmatpush.bf16.msra.mxu0 0
    %1456 = vmatpush.bf16.msra.mxu0 0
    %1457 = vmatpush.bf16.msra.mxu0 0
    %1458 = vmatpush.bf16.msra.mxu0 0
    %1459 = vmatpush.bf16.msra.mxu0 %v1228
    %1460 = vmatpush.bf16.msra.mxu0 %v1226
    %1461 = vmatmul.bf16.gmra.mxu0 %v1451
    %v1462 = vpop.f32.mrf.mxu0
    %v1463 = vadd.f32 0.0, %v1462
    %v1464 = vpop.f32.mrf.mxu0
    %1465 = vdwg.mxu0
    %1466 = vmatpush.bf16.msra.mxu0 0
    %1467 = vmatpush.bf16.msra.mxu0 0
    %1468 = vmatpush.bf16.msra.mxu0 0
    %1469 = vmatpush.bf16.msra.mxu0 0
    %1470 = vmatpush.bf16.msra.mxu0 0
    %1471 = vmatpush.bf16.msra.mxu0 0
    %1472 = vmatpush.bf16.msra.mxu0 %v1229
    %1473 = vmatpush.bf16.msra.mxu0 %v1227
    %1474 = vmatmul.bf16.gmra.mxu0 %v1451
    %v1475 = vpop.f32.mrf.mxu0
    %v1476 = vadd.f32 0.0, %v1475
    %v1477 = vpop.f32.mrf.mxu0
    %1478 = vdwg.mxu0
    %v1479 = vsel %vm354, %v1463, %v1476
    %v1480 = vadd.f32 %v1479, %v1209
    %v1481 = vtanh.pop %v1480
    %v1482 = vxor.u32 %v1480, 2147483648
    %v1483 = vmul.f32 %v1482, 1.442695
    %v1484 = vpow.pop %v1483
    %v1485 = vadd.f32 %v1484, 1.0
    %v1486 = vrcp.pop %v1485
    %v1487 = vmul.f32 %v1485, %v1486
    %v1488 = vsub.f32 1.0, %v1487
    %v1489 = vmul.f32 %v1486, %v1488
    %v1490 = vadd.f32 %v1486, %v1489
    %vm1491 = vweird.f32 %v1485
    %vm1492 = vweird.f32 %v1486
    %vm1493 = vmor %vm1491, %vm1492
    %v1494 = vsel %vm1493, %v1486, %v1490
    %v1495 = vand.u32 2147483647, %v1485
    %vm1496 = vcmp.eq.f32.partialorder %v1495, 8.507059e+37
    %v1497 = vand.u32 %v1485, 2147483648
    %v1498 = vor.u32 1.1754944e-38, %v1497
    %v1499 = vsel %vm1496, %v1498, %v1494
    %v1500 = vmul.f32 1.0, %v1499
    %v1501 = vsel %vm367, %v1481, %v1500
    %v1502 = vmul.f32 %v1501, %v1439
    %1504 = vrot.lane.b32.xlu0 %v1501, 64
    %v1505 = vpop.permute.xlu0 %1504
    %v1507 = vmul.f32 %v1501, %v1505
    %1509 = vrot.lane.b32.xlu0 %v1507, 32
    %v1510 = vpop.permute.xlu0 %1509
    %v1512 = vadd.f32 %v1502, %v1510
    %v1513 = vtanh.pop %v1512
    %1515 = vrot.lane.b32.xlu0 %v1513, 64
    %v1516 = vpop.permute.xlu0 %1515
    %v1518 = vmul.f32 %v1501, %v1516
    %v1519 = vpack.c.bf16 %v1518, %v1518
    %1521 = vrot.lane.b32.xlu0 %v1519, 32
    %v1522 = vpop.permute.xlu0 %1521
    %v1524 = vsel %vm162, %v1522, 0
    %1526 = vmatpush.bf16.msra.mxu0 0
    %1527 = vmatpush.bf16.msra.mxu0 0
    %1528 = vmatpush.bf16.msra.mxu0 0
    %1529 = vmatpush.bf16.msra.mxu0 0
    %1530 = vmatpush.bf16.msra.mxu0 0
    %1531 = vmatpush.bf16.msra.mxu0 0
    %1532 = vmatpush.bf16.msra.mxu0 %v1228
    %1533 = vmatpush.bf16.msra.mxu0 %v1226
    %1534 = vmatmul.bf16.gmra.mxu0 %v1524
    %v1535 = vpop.f32.mrf.mxu0
    %v1536 = vadd.f32 0.0, %v1535
    %v1537 = vpop.f32.mrf.mxu0
    %1538 = vdwg.mxu0
    %1539 = vmatpush.bf16.msra.mxu0 0
    %1540 = vmatpush.bf16.msra.mxu0 0
    %1541 = vmatpush.bf16.msra.mxu0 0
    %1542 = vmatpush.bf16.msra.mxu0 0
    %1543 = vmatpush.bf16.msra.mxu0 0
    %1544 = vmatpush.bf16.msra.mxu0 0
    %1545 = vmatpush.bf16.msra.mxu0 %v1229
    %1546 = vmatpush.bf16.msra.mxu0 %v1227
    %1547 = vmatmul.bf16.gmra.mxu0 %v1524
    %v1548 = vpop.f32.mrf.mxu0
    %v1549 = vadd.f32 0.0, %v1548
    %v1550 = vpop.f32.mrf.mxu0
    %1551 = vdwg.mxu0
    %v1552 = vsel %vm354, %v1536, %v1549
    %v1553 = vadd.f32 %v1552, %v1210
    %v1554 = vtanh.pop %v1553
    %v1555 = vxor.u32 %v1553, 2147483648
    %v1556 = vmul.f32 %v1555, 1.442695
    %v1557 = vpow.pop %v1556
    %v1558 = vadd.f32 %v1557, 1.0
    %v1559 = vrcp.pop %v1558
    %v1560 = vmul.f32 %v1558, %v1559
    %v1561 = vsub.f32 1.0, %v1560
    %v1562 = vmul.f32 %v1559, %v1561
    %v1563 = vadd.f32 %v1559, %v1562
    %vm1564 = vweird.f32 %v1558
    %vm1565 = vweird.f32 %v1559
    %vm1566 = vmor %vm1564, %vm1565
    %v1567 = vsel %vm1566, %v1559, %v1563
    %v1568 = vand.u32 2147483647, %v1558
    %vm1569 = vcmp.eq.f32.partialorder %v1568, 8.507059e+37
    %v1570 = vand.u32 %v1558, 2147483648
    %v1571 = vor.u32 1.1754944e-38, %v1570
    %v1572 = vsel %vm1569, %v1571, %v1567
    %v1573 = vmul.f32 1.0, %v1572
    %v1574 = vsel %vm367, %v1554, %v1573
    %v1575 = vmul.f32 %v1574, %v1512
    %1577 = vrot.lane.b32.xlu0 %v1574, 64
    %v1578 = vpop.permute.xlu0 %1577
    %v1580 = vmul.f32 %v1574, %v1578
    %1582 = vrot.lane.b32.xlu0 %v1580, 32
    %v1583 = vpop.permute.xlu0 %1582
    %v1585 = vadd.f32 %v1575, %v1583
    %v1586 = vtanh.pop %v1585
    %1588 = vrot.lane.b32.xlu0 %v1586, 64
    %v1589 = vpop.permute.xlu0 %1588
    %v1591 = vmul.f32 %v1574, %v1589
    %v1592 = vpack.c.bf16 %v1591, %v1591
    %1594 = vrot.lane.b32.xlu0 %v1592, 32
    %v1595 = vpop.permute.xlu0 %1594
    %v1597 = vsel %vm162, %v1595, 0
    %1599 = vmatpush.bf16.msra.mxu0 0
    %1600 = vmatpush.bf16.msra.mxu0 0
    %1601 = vmatpush.bf16.msra.mxu0 0
    %1602 = vmatpush.bf16.msra.mxu0 0
    %1603 = vmatpush.bf16.msra.mxu0 0
    %1604 = vmatpush.bf16.msra.mxu0 0
    %1605 = vmatpush.bf16.msra.mxu0 %v1228
    %1606 = vmatpush.bf16.msra.mxu0 %v1226
    %1607 = vmatmul.bf16.gmra.mxu0 %v1597
    %v1608 = vpop.f32.mrf.mxu0
    %v1609 = vadd.f32 0.0, %v1608
    %v1610 = vpop.f32.mrf.mxu0
    %1611 = vdwg.mxu0
    %1612 = vmatpush.bf16.msra.mxu0 0
    %1613 = vmatpush.bf16.msra.mxu0 0
    %1614 = vmatpush.bf16.msra.mxu0 0
    %1615 = vmatpush.bf16.msra.mxu0 0
    %1616 = vmatpush.bf16.msra.mxu0 0
    %1617 = vmatpush.bf16.msra.mxu0 0
    %1618 = vmatpush.bf16.msra.mxu0 %v1229
    %1619 = vmatpush.bf16.msra.mxu0 %v1227
    %1620 = vmatmul.bf16.gmra.mxu0 %v1597
    %v1621 = vpop.f32.mrf.mxu0
    %v1622 = vadd.f32 0.0, %v1621
    %v1623 = vpop.f32.mrf.mxu0
    %1624 = vdwg.mxu0
    %v1625 = vsel %vm354, %v1609, %v1622
    %v1626 = vadd.f32 %v1625, %v1211
    %v1627 = vtanh.pop %v1626
    %v1628 = vxor.u32 %v1626, 2147483648
    %v1629 = vmul.f32 %v1628, 1.442695
    %v1630 = vpow.pop %v1629
    %v1631 = vadd.f32 %v1630, 1.0
    %v1632 = vrcp.pop %v1631
    %v1633 = vmul.f32 %v1631, %v1632
    %v1634 = vsub.f32 1.0, %v1633
    %v1635 = vmul.f32 %v1632, %v1634
    %v1636 = vadd.f32 %v1632, %v1635
    %vm1637 = vweird.f32 %v1631
    %vm1638 = vweird.f32 %v1632
    %vm1639 = vmor %vm1637, %vm1638
    %v1640 = vsel %vm1639, %v1632, %v1636
    %v1641 = vand.u32 2147483647, %v1631
    %vm1642 = vcmp.eq.f32.partialorder %v1641, 8.507059e+37
    %v1643 = vand.u32 %v1631, 2147483648
    %v1644 = vor.u32 1.1754944e-38, %v1643
    %v1645 = vsel %vm1642, %v1644, %v1640
    %v1646 = vmul.f32 1.0, %v1645
    %v1647 = vsel %vm367, %v1627, %v1646
    %v1648 = vmul.f32 %v1647, %v1585
    %1650 = vrot.lane.b32.xlu0 %v1647, 64
    %v1651 = vpop.permute.xlu0 %1650
    %v1653 = vmul.f32 %v1647, %v1651
    %1655 = vrot.lane.b32.xlu0 %v1653, 32
    %v1656 = vpop.permute.xlu0 %1655
    %v1658 = vadd.f32 %v1648, %v1656
    %v1659 = vtanh.pop %v1658
    %1661 = vrot.lane.b32.xlu0 %v1659, 64
    %v1662 = vpop.permute.xlu0 %1661
    %v1664 = vmul.f32 %v1647, %v1662
    %v1665 = vpack.c.bf16 %v1664, %v1664
    %1667 = vrot.lane.b32.xlu0 %v1665, 32
    %v1668 = vpop.permute.xlu0 %1667
    %v1670 = vsel %vm162, %v1668, 0
    %1672 = vmatpush.bf16.msra.mxu0 0
    %1673 = vmatpush.bf16.msra.mxu0 0
    %1674 = vmatpush.bf16.msra.mxu0 0
    %1675 = vmatpush.bf16.msra.mxu0 0
    %1676 = vmatpush.bf16.msra.mxu0 0
    %1677 = vmatpush.bf16.msra.mxu0 0
    %1678 = vmatpush.bf16.msra.mxu0 %v1228
    %1679 = vmatpush.bf16.msra.mxu0 %v1226
    %1680 = vmatmul.bf16.gmra.mxu0 %v1670
    %v1681 = vpop.f32.mrf.mxu0
    %v1682 = vadd.f32 0.0, %v1681
    %v1683 = vpop.f32.mrf.mxu0
    %1684 = vdwg.mxu0
    %1685 = vmatpush.bf16.msra.mxu0 0
    %1686 = vmatpush.bf16.msra.mxu0 0
    %1687 = vmatpush.bf16.msra.mxu0 0
    %1688 = vmatpush.bf16.msra.mxu0 0
    %1689 = vmatpush.bf16.msra.mxu0 0
    %1690 = vmatpush.bf16.msra.mxu0 0
    %1691 = vmatpush.bf16.msra.mxu0 %v1229
    %1692 = vmatpush.bf16.msra.mxu0 %v1227
    %1693 = vmatmul.bf16.gmra.mxu0 %v1670
    %v1694 = vpop.f32.mrf.mxu0
    %v1695 = vadd.f32 0.0, %v1694
    %v1696 = vpop.f32.mrf.mxu0
    %1697 = vdwg.mxu0
    %v1698 = vsel %vm354, %v1682, %v1695
    %v1699 = vadd.f32 %v1698, %v1212
    %v1700 = vtanh.pop %v1699
    %v1701 = vxor.u32 %v1699, 2147483648
    %v1702 = vmul.f32 %v1701, 1.442695
    %v1703 = vpow.pop %v1702
    %v1704 = vadd.f32 %v1703, 1.0
    %v1705 = vrcp.pop %v1704
    %v1706 = vmul.f32 %v1704, %v1705
    %v1707 = vsub.f32 1.0, %v1706
    %v1708 = vmul.f32 %v1705, %v1707
    %v1709 = vadd.f32 %v1705, %v1708
    %vm1710 = vweird.f32 %v1704
    %vm1711 = vweird.f32 %v1705
    %vm1712 = vmor %vm1710, %vm1711
    %v1713 = vsel %vm1712, %v1705, %v1709
    %v1714 = vand.u32 2147483647, %v1704
    %vm1715 = vcmp.eq.f32.partialorder %v1714, 8.507059e+37
    %v1716 = vand.u32 %v1704, 2147483648
    %v1717 = vor.u32 1.1754944e-38, %v1716
    %v1718 = vsel %vm1715, %v1717, %v1713
    %v1719 = vmul.f32 1.0, %v1718
    %v1720 = vsel %vm367, %v1700, %v1719
    %v1721 = vmul.f32 %v1720, %v1658
    %1723 = vrot.lane.b32.xlu0 %v1720, 64
    %v1724 = vpop.permute.xlu0 %1723
    %v1726 = vmul.f32 %v1720, %v1724
    %1728 = vrot.lane.b32.xlu0 %v1726, 32
    %v1729 = vpop.permute.xlu0 %1728
    %v1731 = vadd.f32 %v1721, %v1729
    %v1732 = vtanh.pop %v1731
    %1734 = vrot.lane.b32.xlu0 %v1732, 64
    %v1735 = vpop.permute.xlu0 %1734
    %v1737 = vmul.f32 %v1720, %v1735
    %v1738 = vpack.c.bf16 %v1737, %v1737
    %1740 = vrot.lane.b32.xlu0 %v1738, 32
    %v1741 = vpop.permute.xlu0 %1740
    %v1743 = vsel %vm162, %v1741, 0
    %1745 = vmatpush.bf16.msra.mxu0 0
    %1746 = vmatpush.bf16.msra.mxu0 0
    %1747 = vmatpush.bf16.msra.mxu0 0
    %1748 = vmatpush.bf16.msra.mxu0 0
    %1749 = vmatpush.bf16.msra.mxu0 0
    %1750 = vmatpush.bf16.msra.mxu0 0
    %1751 = vmatpush.bf16.msra.mxu0 %v1228
    %1752 = vmatpush.bf16.msra.mxu0 %v1226
    %1753 = vmatmul.bf16.gmra.mxu0 %v1743
    %v1754 = vpop.f32.mrf.mxu0
    %v1755 = vadd.f32 0.0, %v1754
    %v1756 = vpop.f32.mrf.mxu0
    %1757 = vdwg.mxu0
    %1758 = vmatpush.bf16.msra.mxu0 0
    %1759 = vmatpush.bf16.msra.mxu0 0
    %1760 = vmatpush.bf16.msra.mxu0 0
    %1761 = vmatpush.bf16.msra.mxu0 0
    %1762 = vmatpush.bf16.msra.mxu0 0
    %1763 = vmatpush.bf16.msra.mxu0 0
    %1764 = vmatpush.bf16.msra.mxu0 %v1229
    %1765 = vmatpush.bf16.msra.mxu0 %v1227
    %1766 = vmatmul.bf16.gmra.mxu0 %v1743
    %v1767 = vpop.f32.mrf.mxu0
    %v1768 = vadd.f32 0.0, %v1767
    %v1769 = vpop.f32.mrf.mxu0
    %1770 = vdwg.mxu0
    %v1771 = vsel %vm354, %v1755, %v1768
    %v1772 = vadd.f32 %v1771, %v1213
    %v1773 = vtanh.pop %v1772
    %v1774 = vxor.u32 %v1772, 2147483648
    %v1775 = vmul.f32 %v1774, 1.442695
    %v1776 = vpow.pop %v1775
    %v1777 = vadd.f32 %v1776, 1.0
    %v1778 = vrcp.pop %v1777
    %v1779 = vmul.f32 %v1777, %v1778
    %v1780 = vsub.f32 1.0, %v1779
    %v1781 = vmul.f32 %v1778, %v1780
    %v1782 = vadd.f32 %v1778, %v1781
    %vm1783 = vweird.f32 %v1777
    %vm1784 = vweird.f32 %v1778
    %vm1785 = vmor %vm1783, %vm1784
    %v1786 = vsel %vm1785, %v1778, %v1782
    %v1787 = vand.u32 2147483647, %v1777
    %vm1788 = vcmp.eq.f32.partialorder %v1787, 8.507059e+37
    %v1789 = vand.u32 %v1777, 2147483648
    %v1790 = vor.u32 1.1754944e-38, %v1789
    %v1791 = vsel %vm1788, %v1790, %v1786
    %v1792 = vmul.f32 1.0, %v1791
    %v1793 = vsel %vm367, %v1773, %v1792
    %v1794 = vmul.f32 %v1793, %v1731
    %1796 = vrot.lane.b32.xlu0 %v1793, 64
    %v1797 = vpop.permute.xlu0 %1796
    %v1799 = vmul.f32 %v1793, %v1797
    %1801 = vrot.lane.b32.xlu0 %v1799, 32
    %v1802 = vpop.permute.xlu0 %1801
    %v1804 = vadd.f32 %v1794, %v1802
    %v1805 = vtanh.pop %v1804
    %1807 = vrot.lane.b32.xlu0 %v1805, 64
    %v1808 = vpop.permute.xlu0 %1807
    %v1810 = vmul.f32 %v1793, %v1808
    %1812 = vrot.lane.b32.xlu0 %v1810, 32
    %v1813 = vpop.permute.xlu0 %1812
    %v1815 = vrot.slane %v1810, 4
    %1816 = vrot.lane.b32.xlu0 %v1815, 64
    %v1817 = vpop.permute.xlu0 %1816
    %v1819 = vsel %vm162, %v1813, %v1817
    %v1820 = vld [vmem:[#allocation10] sm:$0xff]
    %v1821 = vld [vmem:[#allocation10 + $0x8] sm:$0xff]
    %v1822 = vld [vmem:[#allocation10 + $0x10] sm:$0xff]
    %v1823 = vld [vmem:[#allocation10 + $0x18] sm:$0xff]
    %v1824 = vld [vmem:[#allocation10 + $0x20] sm:$0xff]
    %v1825 = vld [vmem:[#allocation10 + $0x28] sm:$0xff]
    %v1826 = vld [vmem:[#allocation10 + $0x30] sm:$0xff]
    %v1827 = vld [vmem:[#allocation10 + $0x38] sm:$0xff]
    %v1828 = vld [vmem:[%s10] sm:$0x1]
    %v1830 = vperm.slane %v1828, 0
    %v1833 = vsel %vm1099, %v1819, 0
    %1835 = vmatpush.msra.mxu0 0.0
    %1836 = vmatpush.msra.mxu0 0.0
    %1837 = vmatpush.msra.mxu0 0.0
    %1838 = vmatpush.msra.mxu0 0.0
    %1839 = vmatpush.msra.mxu0 0.0
    %1840 = vmatpush.msra.mxu0 0.0
    %1841 = vmatpush.msra.mxu0 0.0
    %1842 = vmatpush.msra.mxu0 0.0
    %1843 = vmatpush.msra.mxu0 %v1827
    %1844 = vmatpush.msra.mxu0 %v1826
    %1845 = vmatpush.msra.mxu0 %v1825
    %1846 = vmatpush.msra.mxu0 %v1824
    %1847 = vmatpush.msra.mxu0 %v1823
    %1848 = vmatpush.msra.mxu0 %v1822
    %1849 = vmatpush.msra.mxu0 %v1821
    %1850 = vmatpush.msra.mxu0 %v1820
    %1851 = vmatmul.f32.gmra.mxu0 %v1833
    %v1852 = vpop.f32.mrf.mxu0
    %v1853 = vadd.f32 %v1830, %v1852
    %1854 = vdwg.mxu0
    %v1855 = vmax.f32 %v1853, 0.0
    %v1856 = vld [vmem:[%s11] sm:$0xff]
    %v1857 = vld [vmem:[%s11 + $0x8] sm:$0xff]
    %v1858 = vld [vmem:[%s11 + $0x10] sm:$0xff]
    %v1859 = vld [vmem:[%s11 + $0x18] sm:$0xff]
    %v1860 = vld [vmem:[%s11 + $0x20] sm:$0xff]
    %v1861 = vld [vmem:[%s11 + $0x28] sm:$0xff]
    %v1862 = vld [vmem:[%s11 + $0x30] sm:$0xff]
    %v1863 = vld [vmem:[%s11 + $0x38] sm:$0xff]
    %v1864 = vld [vmem:[%s12] sm:$0x1]
    %v1866 = vperm.slane %v1864, 0
    %v1869 = vsel %vm1099, %v1855, 0
    %1871 = vmatpush.msra.mxu0 0.0
    %1872 = vmatpush.msra.mxu0 0.0
    %1873 = vmatpush.msra.mxu0 0.0
    %1874 = vmatpush.msra.mxu0 0.0
    %1875 = vmatpush.msra.mxu0 0.0
    %1876 = vmatpush.msra.mxu0 0.0
    %1877 = vmatpush.msra.mxu0 0.0
    %1878 = vmatpush.msra.mxu0 0.0
    %1879 = vmatpush.msra.mxu0 %v1863
    %1880 = vmatpush.msra.mxu0 %v1862
    %1881 = vmatpush.msra.mxu0 %v1861
    %1882 = vmatpush.msra.mxu0 %v1860
    %1883 = vmatpush.msra.mxu0 %v1859
    %1884 = vmatpush.msra.mxu0 %v1858
    %1885 = vmatpush.msra.mxu0 %v1857
    %1886 = vmatpush.msra.mxu0 %v1856
    %1887 = vmatmul.f32.gmra.mxu0 %v1869
    %v1888 = vpop.f32.mrf.mxu0
    %v1889 = vadd.f32 %v1866, %v1888
    %1890 = vdwg.mxu0
    %v1892 = vrot.slane %v1889, 2
    %1893 = vrot.lane.b32.xlu0 %v1892, 16
    %v1894 = vpop.permute.xlu0 %1893
    %vm1896 = vcmask 130048
    %v1897 = vsel %vm1896, %v1889, %v1894
    %v1898 = vld [vmem:[%s13] sm:$0xff]
    %v1899 = vld [vmem:[%s13 + $0x8] sm:$0xff]
    %v1900 = vld [vmem:[%s13 + $0x10] sm:$0xff]
    %v1901 = vld [vmem:[%s13 + $0x18] sm:$0xff]
    %v1902 = vld [vmem:[#allocation11] sm:$0x1]
    %v1904 = vperm.slane %v1902, 0
    %v1907 = vsel %vm162, %v1897, 0
    %1909 = vmatpush.msra.mxu0 0.0
    %1910 = vmatpush.msra.mxu0 0.0
    %1911 = vmatpush.msra.mxu0 0.0
    %1912 = vmatpush.msra.mxu0 0.0
    %1913 = vmatpush.msra.mxu0 0.0
    %1914 = vmatpush.msra.mxu0 0.0
    %1915 = vmatpush.msra.mxu0 0.0
    %1916 = vmatpush.msra.mxu0 0.0
    %1917 = vmatpush.msra.mxu0 0.0
    %1918 = vmatpush.msra.mxu0 0.0
    %1919 = vmatpush.msra.mxu0 0.0
    %1920 = vmatpush.msra.mxu0 0.0
    %1921 = vmatpush.msra.mxu0 %v1901
    %1922 = vmatpush.msra.mxu0 %v1900
    %1923 = vmatpush.msra.mxu0 %v1899
    %1924 = vmatpush.msra.mxu0 %v1898
    %1925 = vmatmul.f32.gmra.mxu0 %v1907
    %v1926 = vpop.f32.mrf.mxu0
    %v1927 = vadd.f32 %v1904, %v1926
    %1928 = vdwg.mxu0
    %v1929 = vmax.f32 %v1927, 0.0
    %v1930 = vld [vmem:[%s15] sm:$0xff]
    %v1931 = vld [vmem:[%s15 + $0x8] sm:$0x3]
    %v1932 = vld [vmem:[%s16] sm:$0x1]
    %v1934 = vperm.slane %v1932, 0
    %vm1936 = vcmask 80896
    %v1938 = vsel %vm1936, %v1929, 0
    %vm1940 = vcmask 1041408
    %v1942 = vsel %vm1940, %v1931, 0
    %1944 = vmatpush.msra.mxu0 0.0
    %1945 = vmatpush.msra.mxu0 0.0
    %1946 = vmatpush.msra.mxu0 0.0
    %1947 = vmatpush.msra.mxu0 0.0
    %1948 = vmatpush.msra.mxu0 0.0
    %1949 = vmatpush.msra.mxu0 0.0
    %1950 = vmatpush.msra.mxu0 0.0
    %1951 = vmatpush.msra.mxu0 0.0
    %1952 = vmatpush.msra.mxu0 0.0
    %1953 = vmatpush.msra.mxu0 0.0
    %1954 = vmatpush.msra.mxu0 0.0
    %1955 = vmatpush.msra.mxu0 0.0
    %1956 = vmatpush.msra.mxu0 0.0
    %1957 = vmatpush.msra.mxu0 0.0
    %1958 = vmatpush.msra.mxu0 %v1942
    %1959 = vmatpush.msra.mxu0 %v1930
    %1960 = vmatmul.f32.gmra.mxu0 %v1938
    %v1961 = vpop.f32.mrf.mxu0
    %v1962 = vadd.f32 %v1934, %v1961
    %1963 = vdwg.mxu0
    %vm1964 = vcmask 9216
    %1965 = vst.msk [vmem:[#allocation13] sm:$0x3] %vm1964, %v1962
    // Predicated region
    $region94: #{lstm_forward.1} parent=1 // pred_check
      _
    $region95: #{lstm_forward.1} parent=1 // pred_check_branch
      %1967 = sbr.rel (0) target = $region97
    $region96: #{lstm_forward.1} parent=1 // pred_region
      %1969 = vsyncadd [#allocation4], 0
      %s1971 = sshll.u32 [#allocation13], 4
      %s1972 = int_to_ptr.vmem [resolvable:$true] %s1971
      %s1973 = sshll.u32 %s17, 4
      %s1974 = int_to_ptr.hbm [resolvable:$true] %s1973
      %1976 = dma.vmem_to_hbm [thread:$0]  %s1972, 32, %s1974, [#allocation4]
    $region97: #{lstm_forward.1} parent=1 // pred_fallthru
      _
    // Predicated region
    $region98: #{lstm_forward.1} parent=1 // pred_check
      _
    $region99: #{lstm_forward.1} parent=1 // pred_check_branch
      %1978 = sbr.rel (0) target = $region101
    $region100: #{lstm_forward.1} parent=1 // pred_region
      %1980 = dma.done [#allocation4], 32
    $region101: #{lstm_forward.1} parent=1 // pred_fallthru
      _
    %1981 = vsyncpa [#allocation3], 1
    %1982 = vsyncpa [#allocation6], 1
    %1983 = vsyncpa [#allocation9], 1
    %1984 = vsyncpa [#allocation12], 1
    %1985 = vsyncpa [#allocation4], 1

</llo_original>
